<compile_context>
chip_gen: v7x
topology: tpu7x:2x2x1
jax: 0.10.0
libtpu: 0.0.40
codegen_flags: <defaults>
</compile_context>

<pallas_src>
import functools

import jax
import jax.numpy as jnp
from jax.experimental import pallas as pl
from jax.experimental.pallas import tpu as pltpu

HIDDEN = 32
INPUT = 3
_KPAD = 8          # input-feature contraction dim padded to a sublane multiple
_MAX_STEPS = 128   # max rollout length handled by one kernel invocation


def _lstm_rollout_kernel(feats_ref, h0_ref, c0_ref,
                         wih_ref, whh_ref, bg_ref, wout_ref, bout_ref,
                         out_ref, hn_ref, cn_ref,
                         xproj_ref, hall_ref, *, seq_len, hidden, unroll):
    H = hidden

    # ---- Phase 1: hoisted input projection for ALL timesteps (one MXU matmul).
    #      x_proj[t] = feats[t] @ W_ih^T + (b_ih + b_hh)
    xproj_ref[...] = (
        jnp.dot(feats_ref[...], wih_ref[...], preferred_element_type=jnp.float32)
        + bg_ref[...])
    # Zero the h-history scratch so padded rows of the post-loop head are benign.
    hall_ref[...] = jnp.zeros_like(hall_ref)

    # Loop-invariant weight load (stays resident in vregs across the recurrence).
    w_hh = whh_ref[...]        # (H, 4H)

    # ---- Phase 2: serial recurrence, entirely in vregs/VMEM (no HBM traffic).
    def step(t, carry):
        h, c = carry                                                  # (1,H),(1,H)
        gates = (xproj_ref[pl.ds(t, 1), :]
                 + jnp.dot(h, w_hh, preferred_element_type=jnp.float32))  # (1,4H)
        sig = jax.nn.sigmoid(gates)            # one whole-vreg EUP pass (i,f,o)
        i_g = sig[:, 0:H]
        f_g = sig[:, H:2 * H]
        o_g = sig[:, 3 * H:4 * H]
        g_g = jnp.tanh(gates[:, 2 * H:3 * H])  # tanh only on the g lanes
        # TODO(synk): make the lane re-alignments explicit pltpu.roll shifts once
        # the rotate direction is validated on HW; static slices are the
        # verified-correct form and already ride the XLU.
        c_new = f_g * c + i_g * g_g
        h_new = o_g * jnp.tanh(c_new)
        hall_ref[pl.ds(t, 1), :] = h_new       # cheap per-step sublane row store
        return h_new, c_new

    h_fin, c_fin = jax.lax.fori_loop(0, seq_len, step,
                                     (h0_ref[...], c0_ref[...]),
                                     unroll=unroll)

    # ---- Phase 3: whole-rollout linear head as ONE off-critical-path matmul,
    #      then bias + softplus and a single store.
    head = jnp.dot(hall_ref[...], wout_ref[...],
                   preferred_element_type=jnp.float32)            # (128, 1)
    out_ref[...] = jax.nn.softplus(head + bout_ref[...])
    hn_ref[...] = h_fin
    cn_ref[...] = c_fin


@functools.partial(jax.jit, static_argnames=("hidden_size",))
def lstm_decision_rollout(feats_seq, hx, cx, params, hidden_size=HIDDEN):
    """Fused T-step rollout of LSTMDecisionNetwork.forward().

    feats_seq: (T, 3) f32   one feature vector per forward() call
    hx, cx:    (1, hidden_size) f32   state from reset() (zeros) or a prior rollout
    returns (out (T, 1), new_hx, new_cx)
    """
    t_steps, in_dim = feats_seq.shape
    if t_steps > _MAX_STEPS:
        raise ValueError("rollout length must be <= 128 per kernel invocation")
    t_pad = ((t_steps + 7) // 8) * 8
    feats_p = (jnp.zeros((t_pad, _KPAD), jnp.float32)
               .at[:t_steps, :in_dim].set(feats_seq))

    vspec = pl.BlockSpec(memory_space=pltpu.MemorySpace.VMEM)
    unroll = True if t_steps <= 16 else 8      # bound live ranges for long T
    kernel = functools.partial(_lstm_rollout_kernel,
                               seq_len=t_steps, hidden=hidden_size,
                               unroll=unroll)
    out_col, hn, cn = pl.pallas_call(
        kernel,
        out_shape=(
            jax.ShapeDtypeStruct((_MAX_STEPS, 1), jnp.float32),
            jax.ShapeDtypeStruct((1, hidden_size), jnp.float32),
            jax.ShapeDtypeStruct((1, hidden_size), jnp.float32),
        ),
        in_specs=[vspec] * 8,
        out_specs=(vspec, vspec, vspec),
        scratch_shapes=[
            pltpu.VMEM((t_pad, 4 * hidden_size), jnp.float32),      # x_proj
            pltpu.VMEM((_MAX_STEPS, hidden_size), jnp.float32),     # h history
        ],
    )(feats_p, hx, cx,
      params["w_ih_t_pad"], params["w_hh_t"], params["b_gates"],
      params["w_out_col"], params["b_out"])
    return out_col[:t_steps], hn, cn


def init_torch_params(key, hidden_size=HIDDEN, input_size=INPUT):
    """Deterministic synthetic parameters with the PyTorch module's shapes."""
    k1, k2, k3, k4, k5, k6 = jax.random.split(key, 6)
    bound = 1.0 / jnp.sqrt(hidden_size)
    return {
        "w_ih": jax.random.uniform(k1, (4 * hidden_size, input_size), jnp.float32, -bound, bound),
        "w_hh": jax.random.uniform(k2, (4 * hidden_size, hidden_size), jnp.float32, -bound, bound),
        "b_ih": jax.random.uniform(k3, (4 * hidden_size,), jnp.float32, -bound, bound),
        "b_hh": jax.random.uniform(k4, (4 * hidden_size,), jnp.float32, -bound, bound),
        "w_lin": jax.random.uniform(k5, (1, hidden_size), jnp.float32, -bound, bound),
        "b_lin": jax.random.uniform(k6, (1,), jnp.float32, -bound, bound),
    }


def pack_params(raw, hidden_size=HIDDEN, input_size=INPUT):
    """Kernel layout: transposed weights, fused gate bias, padded contraction dim."""
    w_ih_t_pad = (jnp.zeros((_KPAD, 4 * hidden_size), jnp.float32)
                  .at[:input_size].set(raw["w_ih"].T))
    return {
        "w_ih_t_pad": w_ih_t_pad,                               # (8, 4H)
        "w_hh_t": raw["w_hh"].T,                                # (H, 4H)
        "b_gates": (raw["b_ih"] + raw["b_hh"]).reshape(1, -1),  # (1, 4H)
        "w_out_col": raw["w_lin"].T,                            # (H, 1)
        "b_out": raw["b_lin"].reshape(1, 1),                    # (1, 1)
    }


def reference_rollout(feats_seq, hx, cx, raw):
    """Pure-JAX reference matching PyTorch LSTMCell + Linear + softplus."""
    def step(carry, x):
        h, c = carry
        gates = (x[None, :] @ raw["w_ih"].T + raw["b_ih"]
                 + h @ raw["w_hh"].T + raw["b_hh"])
        i, f, g, o = jnp.split(gates, 4, axis=-1)
        c = jax.nn.sigmoid(f) * c + jax.nn.sigmoid(i) * jnp.tanh(g)
        h = jax.nn.sigmoid(o) * jnp.tanh(c)
        y = jax.nn.softplus(h @ raw["w_lin"].T + raw["b_lin"])
        return (h, c), y.reshape(-1)

    (h, c), ys = jax.lax.scan(step, (hx, cx), feats_seq)
    return ys, h, c


if __name__ == "__main__":
    key = jax.random.PRNGKey(0)
    pkey, xkey = jax.random.split(key)
    raw = init_torch_params(pkey)
    params = pack_params(raw)

    T = 8  # short rollout of forward() calls
    feats_seq = jax.random.normal(xkey, (T, INPUT), dtype=jnp.float32)

    # reset(): zero hidden / cell state (the stateful part lives in the wrapper)
    hx = jnp.zeros((1, HIDDEN), jnp.float32)
    cx = jnp.zeros((1, HIDDEN), jnp.float32)

    out_seq, hn, cn = lstm_decision_rollout(feats_seq, hx, cx, params)
    jax.block_until_ready((out_seq, hn, cn))

    ref_out, ref_h, ref_c = reference_rollout(feats_seq, hx, cx, raw)
    assert out_seq.shape == (T, 1)
    assert bool(jnp.all(out_seq >= 0.0))                       # softplus >= 0
    assert bool(jnp.allclose(out_seq, ref_out, rtol=1e-3, atol=1e-3))
    assert bool(jnp.allclose(hn, ref_h, rtol=1e-3, atol=1e-3))
    assert bool(jnp.allclose(cn, ref_c, rtol=1e-3, atol=1e-3))
    print("KERNEL_OK")
</pallas_src>

<mosaic_0001>
module attributes {stable_mosaic.version = 11 : i64} {
  func.func @_lstm_rollout_kernel(%arg0: memref<8x8xf32, #tpu.memory_space<vmem>>, %arg1: memref<1x32xf32, #tpu.memory_space<vmem>>, %arg2: memref<1x32xf32, #tpu.memory_space<vmem>>, %arg3: memref<8x128xf32, #tpu.memory_space<vmem>>, %arg4: memref<32x128xf32, #tpu.memory_space<vmem>>, %arg5: memref<1x128xf32, #tpu.memory_space<vmem>>, %arg6: memref<32x1xf32, #tpu.memory_space<vmem>>, %arg7: memref<1x1xf32, #tpu.memory_space<vmem>>, %arg8: memref<128x1xf32, #tpu.memory_space<vmem>>, %arg9: memref<1x32xf32, #tpu.memory_space<vmem>>, %arg10: memref<1x32xf32, #tpu.memory_space<vmem>>, %arg11: memref<8x128xf32, #tpu.memory_space<vmem>>, %arg12: memref<128x32xf32, #tpu.memory_space<vmem>>) attributes {dimension_semantics = [], scalar_prefetch = 0 : i64, scratch_operands = 2 : i64, tpu.core_type = #tpu.core_type<tc>} {
    %c0 = arith.constant 0 : index
    %c0_0 = arith.constant 0 : index
    %0 = vector.load %arg0[%c0, %c0_0] : memref<8x8xf32, #tpu.memory_space<vmem>>, vector<8x8xf32>
    %c0_1 = arith.constant 0 : index
    %c0_2 = arith.constant 0 : index
    %1 = vector.load %arg3[%c0_1, %c0_2] : memref<8x128xf32, #tpu.memory_space<vmem>>, vector<8x128xf32>
    %cst = arith.constant dense<0.000000e+00> : vector<8x128xf32>
    %2 = tpu.matmul %0, %1, %cst {dimension_numbers = #tpu.dot_dimension_numbers<[1], [0], [0], [1], [0, 0, 1, 1], [], []>} : vector<8x8xf32>, vector<8x128xf32>, vector<8x128xf32> -> vector<8x128xf32>
    %c0_3 = arith.constant 0 : index
    %c0_4 = arith.constant 0 : index
    %3 = vector.load %arg5[%c0_3, %c0_4] : memref<1x128xf32, #tpu.memory_space<vmem>>, vector<1x128xf32>
    %4 = vector.broadcast %3 : vector<1x128xf32> to vector<8x128xf32>
    %5 = arith.addf %2, %4 : vector<8x128xf32>
    %c0_5 = arith.constant 0 : index
    %c0_6 = arith.constant 0 : index
    %6 = vector.load %arg11[%c0_5, %c0_6] : memref<8x128xf32, #tpu.memory_space<vmem>>, vector<8x128xf32>
    tpu.vector_store %arg11[%c0_5, %c0_6], %5 {strides = array<i32>} : memref<8x128xf32, #tpu.memory_space<vmem>>, vector<8x128xf32>,
    %cst_7 = arith.constant 0.000000e+00 : f32
    %7 = vector.broadcast %cst_7 : f32 to vector<128x32xf32>
    %c0_8 = arith.constant 0 : index
    %c0_9 = arith.constant 0 : index
    %8 = vector.load %arg12[%c0_8, %c0_9] : memref<128x32xf32, #tpu.memory_space<vmem>>, vector<128x32xf32>
    tpu.vector_store %arg12[%c0_8, %c0_9], %7 {strides = array<i32>} : memref<128x32xf32, #tpu.memory_space<vmem>>, vector<128x32xf32>,
    %c0_10 = arith.constant 0 : index
    %c0_11 = arith.constant 0 : index
    %9 = vector.load %arg4[%c0_10, %c0_11] : memref<32x128xf32, #tpu.memory_space<vmem>>, vector<32x128xf32>
    %c0_12 = arith.constant 0 : index
    %c0_13 = arith.constant 0 : index
    %10 = vector.load %arg1[%c0_12, %c0_13] : memref<1x32xf32, #tpu.memory_space<vmem>>, vector<1x32xf32>
    %c0_14 = arith.constant 0 : index
    %c0_15 = arith.constant 0 : index
    %11 = vector.load %arg2[%c0_14, %c0_15] : memref<1x32xf32, #tpu.memory_space<vmem>>, vector<1x32xf32>
    %c0_i32 = arith.constant 0 : i32
    %12 = arith.index_cast %c0_i32 : i32 to index
    %c0_16 = arith.constant 0 : index
    %13 = vector.load %arg11[%12, %c0_16] : memref<8x128xf32, #tpu.memory_space<vmem>>, vector<1x128xf32>
    %cst_17 = arith.constant dense<0.000000e+00> : vector<1x128xf32>
    %14 = tpu.matmul %10, %9, %cst_17 {dimension_numbers = #tpu.dot_dimension_numbers<[1], [0], [0], [1], [0, 0, 1, 1], [], []>} : vector<1x32xf32>, vector<32x128xf32>, vector<1x128xf32> -> vector<1x128xf32>
    %15 = arith.addf %13, %14 : vector<1x128xf32>
    %16 = arith.negf %15 : vector<1x128xf32>
    %17 = math.exp %16 : vector<1x128xf32>
    %cst_18 = arith.constant 1.000000e+00 : f32
    %18 = vector.broadcast %cst_18 : f32 to vector<1x128xf32>
    %19 = arith.addf %18, %17 : vector<1x128xf32>
    %20 = arith.divf %18, %19 : vector<1x128xf32>
    %21 = vector.extract_strided_slice %20 {offsets = [0, 0], sizes = [1, 32], strides = [1, 1]} : vector<1x128xf32> to vector<1x32xf32>
    %22 = vector.extract_strided_slice %20 {offsets = [0, 32], sizes = [1, 32], strides = [1, 1]} : vector<1x128xf32> to vector<1x32xf32>
    %23 = vector.extract_strided_slice %20 {offsets = [0, 96], sizes = [1, 32], strides = [1, 1]} : vector<1x128xf32> to vector<1x32xf32>
    %24 = vector.extract_strided_slice %15 {offsets = [0, 64], sizes = [1, 32], strides = [1, 1]} : vector<1x128xf32> to vector<1x32xf32>
    %25 = math.tanh %24 : vector<1x32xf32>
    %26 = arith.mulf %22, %11 : vector<1x32xf32>
    %27 = arith.mulf %21, %25 : vector<1x32xf32>
    %28 = arith.addf %26, %27 : vector<1x32xf32>
    %29 = math.tanh %28 : vector<1x32xf32>
    %30 = arith.mulf %23, %29 : vector<1x32xf32>
    %31 = arith.index_cast %c0_i32 : i32 to index
    %c0_19 = arith.constant 0 : index
    %32 = vector.load %arg12[%31, %c0_19] : memref<128x32xf32, #tpu.memory_space<vmem>>, vector<1x32xf32>
    tpu.vector_store %arg12[%31, %c0_19], %30 {strides = array<i32>} : memref<128x32xf32, #tpu.memory_space<vmem>>, vector<1x32xf32>,
    %c1_i32 = arith.constant 1 : i32
    %33 = arith.index_cast %c1_i32 : i32 to index
    %c0_20 = arith.constant 0 : index
    %34 = vector.load %arg11[%33, %c0_20] : memref<8x128xf32, #tpu.memory_space<vmem>>, vector<1x128xf32>
    %cst_21 = arith.constant dense<0.000000e+00> : vector<1x128xf32>
    %35 = tpu.matmul %30, %9, %cst_21 {dimension_numbers = #tpu.dot_dimension_numbers<[1], [0], [0], [1], [0, 0, 1, 1], [], []>} : vector<1x32xf32>, vector<32x128xf32>, vector<1x128xf32> -> vector<1x128xf32>
    %36 = arith.addf %34, %35 : vector<1x128xf32>
    %37 = arith.negf %36 : vector<1x128xf32>
    %38 = math.exp %37 : vector<1x128xf32>
    %cst_22 = arith.constant 1.000000e+00 : f32
    %39 = vector.broadcast %cst_22 : f32 to vector<1x128xf32>
    %40 = arith.addf %39, %38 : vector<1x128xf32>
    %41 = arith.divf %39, %40 : vector<1x128xf32>
    %42 = vector.extract_strided_slice %41 {offsets = [0, 0], sizes = [1, 32], strides = [1, 1]} : vector<1x128xf32> to vector<1x32xf32>
    %43 = vector.extract_strided_slice %41 {offsets = [0, 32], sizes = [1, 32], strides = [1, 1]} : vector<1x128xf32> to vector<1x32xf32>
    %44 = vector.extract_strided_slice %41 {offsets = [0, 96], sizes = [1, 32], strides = [1, 1]} : vector<1x128xf32> to vector<1x32xf32>
    %45 = vector.extract_strided_slice %36 {offsets = [0, 64], sizes = [1, 32], strides = [1, 1]} : vector<1x128xf32> to vector<1x32xf32>
    %46 = math.tanh %45 : vector<1x32xf32>
    %47 = arith.mulf %43, %28 : vector<1x32xf32>
    %48 = arith.mulf %42, %46 : vector<1x32xf32>
    %49 = arith.addf %47, %48 : vector<1x32xf32>
    %50 = math.tanh %49 : vector<1x32xf32>
    %51 = arith.mulf %44, %50 : vector<1x32xf32>
    %52 = arith.index_cast %c1_i32 : i32 to index
    %c0_23 = arith.constant 0 : index
    %53 = vector.load %arg12[%52, %c0_23] : memref<128x32xf32, #tpu.memory_space<vmem>>, vector<1x32xf32>
    tpu.vector_store %arg12[%52, %c0_23], %51 {strides = array<i32>} : memref<128x32xf32, #tpu.memory_space<vmem>>, vector<1x32xf32>,
    %c2_i32 = arith.constant 2 : i32
    %54 = arith.index_cast %c2_i32 : i32 to index
    %c0_24 = arith.constant 0 : index
    %55 = vector.load %arg11[%54, %c0_24] : memref<8x128xf32, #tpu.memory_space<vmem>>, vector<1x128xf32>
    %cst_25 = arith.constant dense<0.000000e+00> : vector<1x128xf32>
    %56 = tpu.matmul %51, %9, %cst_25 {dimension_numbers = #tpu.dot_dimension_numbers<[1], [0], [0], [1], [0, 0, 1, 1], [], []>} : vector<1x32xf32>, vector<32x128xf32>, vector<1x128xf32> -> vector<1x128xf32>
    %57 = arith.addf %55, %56 : vector<1x128xf32>
    %58 = arith.negf %57 : vector<1x128xf32>
    %59 = math.exp %58 : vector<1x128xf32>
    %cst_26 = arith.constant 1.000000e+00 : f32
    %60 = vector.broadcast %cst_26 : f32 to vector<1x128xf32>
    %61 = arith.addf %60, %59 : vector<1x128xf32>
    %62 = arith.divf %60, %61 : vector<1x128xf32>
    %63 = vector.extract_strided_slice %62 {offsets = [0, 0], sizes = [1, 32], strides = [1, 1]} : vector<1x128xf32> to vector<1x32xf32>
    %64 = vector.extract_strided_slice %62 {offsets = [0, 32], sizes = [1, 32], strides = [1, 1]} : vector<1x128xf32> to vector<1x32xf32>
    %65 = vector.extract_strided_slice %62 {offsets = [0, 96], sizes = [1, 32], strides = [1, 1]} : vector<1x128xf32> to vector<1x32xf32>
    %66 = vector.extract_strided_slice %57 {offsets = [0, 64], sizes = [1, 32], strides = [1, 1]} : vector<1x128xf32> to vector<1x32xf32>
    %67 = math.tanh %66 : vector<1x32xf32>
    %68 = arith.mulf %64, %49 : vector<1x32xf32>
    %69 = arith.mulf %63, %67 : vector<1x32xf32>
    %70 = arith.addf %68, %69 : vector<1x32xf32>
    %71 = math.tanh %70 : vector<1x32xf32>
    %72 = arith.mulf %65, %71 : vector<1x32xf32>
    %73 = arith.index_cast %c2_i32 : i32 to index
    %c0_27 = arith.constant 0 : index
    %74 = vector.load %arg12[%73, %c0_27] : memref<128x32xf32, #tpu.memory_space<vmem>>, vector<1x32xf32>
    tpu.vector_store %arg12[%73, %c0_27], %72 {strides = array<i32>} : memref<128x32xf32, #tpu.memory_space<vmem>>, vector<1x32xf32>,
    %c3_i32 = arith.constant 3 : i32
    %75 = arith.index_cast %c3_i32 : i32 to index
    %c0_28 = arith.constant 0 : index
    %76 = vector.load %arg11[%75, %c0_28] : memref<8x128xf32, #tpu.memory_space<vmem>>, vector<1x128xf32>
    %cst_29 = arith.constant dense<0.000000e+00> : vector<1x128xf32>
    %77 = tpu.matmul %72, %9, %cst_29 {dimension_numbers = #tpu.dot_dimension_numbers<[1], [0], [0], [1], [0, 0, 1, 1], [], []>} : vector<1x32xf32>, vector<32x128xf32>, vector<1x128xf32> -> vector<1x128xf32>
    %78 = arith.addf %76, %77 : vector<1x128xf32>
    %79 = arith.negf %78 : vector<1x128xf32>
    %80 = math.exp %79 : vector<1x128xf32>
    %cst_30 = arith.constant 1.000000e+00 : f32
    %81 = vector.broadcast %cst_30 : f32 to vector<1x128xf32>
    %82 = arith.addf %81, %80 : vector<1x128xf32>
    %83 = arith.divf %81, %82 : vector<1x128xf32>
    %84 = vector.extract_strided_slice %83 {offsets = [0, 0], sizes = [1, 32], strides = [1, 1]} : vector<1x128xf32> to vector<1x32xf32>
    %85 = vector.extract_strided_slice %83 {offsets = [0, 32], sizes = [1, 32], strides = [1, 1]} : vector<1x128xf32> to vector<1x32xf32>
    %86 = vector.extract_strided_slice %83 {offsets = [0, 96], sizes = [1, 32], strides = [1, 1]} : vector<1x128xf32> to vector<1x32xf32>
    %87 = vector.extract_strided_slice %78 {offsets = [0, 64], sizes = [1, 32], strides = [1, 1]} : vector<1x128xf32> to vector<1x32xf32>
    %88 = math.tanh %87 : vector<1x32xf32>
    %89 = arith.mulf %85, %70 : vector<1x32xf32>
    %90 = arith.mulf %84, %88 : vector<1x32xf32>
    %91 = arith.addf %89, %90 : vector<1x32xf32>
    %92 = math.tanh %91 : vector<1x32xf32>
    %93 = arith.mulf %86, %92 : vector<1x32xf32>
    %94 = arith.index_cast %c3_i32 : i32 to index
    %c0_31 = arith.constant 0 : index
    %95 = vector.load %arg12[%94, %c0_31] : memref<128x32xf32, #tpu.memory_space<vmem>>, vector<1x32xf32>
    tpu.vector_store %arg12[%94, %c0_31], %93 {strides = array<i32>} : memref<128x32xf32, #tpu.memory_space<vmem>>, vector<1x32xf32>,
    %c4_i32 = arith.constant 4 : i32
    %96 = arith.index_cast %c4_i32 : i32 to index
    %c0_32 = arith.constant 0 : index
    %97 = vector.load %arg11[%96, %c0_32] : memref<8x128xf32, #tpu.memory_space<vmem>>, vector<1x128xf32>
    %cst_33 = arith.constant dense<0.000000e+00> : vector<1x128xf32>
    %98 = tpu.matmul %93, %9, %cst_33 {dimension_numbers = #tpu.dot_dimension_numbers<[1], [0], [0], [1], [0, 0, 1, 1], [], []>} : vector<1x32xf32>, vector<32x128xf32>, vector<1x128xf32> -> vector<1x128xf32>
    %99 = arith.addf %97, %98 : vector<1x128xf32>
    %100 = arith.negf %99 : vector<1x128xf32>
    %101 = math.exp %100 : vector<1x128xf32>
    %cst_34 = arith.constant 1.000000e+00 : f32
    %102 = vector.broadcast %cst_34 : f32 to vector<1x128xf32>
    %103 = arith.addf %102, %101 : vector<1x128xf32>
    %104 = arith.divf %102, %103 : vector<1x128xf32>
    %105 = vector.extract_strided_slice %104 {offsets = [0, 0], sizes = [1, 32], strides = [1, 1]} : vector<1x128xf32> to vector<1x32xf32>
    %106 = vector.extract_strided_slice %104 {offsets = [0, 32], sizes = [1, 32], strides = [1, 1]} : vector<1x128xf32> to vector<1x32xf32>
    %107 = vector.extract_strided_slice %104 {offsets = [0, 96], sizes = [1, 32], strides = [1, 1]} : vector<1x128xf32> to vector<1x32xf32>
    %108 = vector.extract_strided_slice %99 {offsets = [0, 64], sizes = [1, 32], strides = [1, 1]} : vector<1x128xf32> to vector<1x32xf32>
    %109 = math.tanh %108 : vector<1x32xf32>
    %110 = arith.mulf %106, %91 : vector<1x32xf32>
    %111 = arith.mulf %105, %109 : vector<1x32xf32>
    %112 = arith.addf %110, %111 : vector<1x32xf32>
    %113 = math.tanh %112 : vector<1x32xf32>
    %114 = arith.mulf %107, %113 : vector<1x32xf32>
    %115 = arith.index_cast %c4_i32 : i32 to index
    %c0_35 = arith.constant 0 : index
    %116 = vector.load %arg12[%115, %c0_35] : memref<128x32xf32, #tpu.memory_space<vmem>>, vector<1x32xf32>
    tpu.vector_store %arg12[%115, %c0_35], %114 {strides = array<i32>} : memref<128x32xf32, #tpu.memory_space<vmem>>, vector<1x32xf32>,
    %c5_i32 = arith.constant 5 : i32
    %117 = arith.index_cast %c5_i32 : i32 to index
    %c0_36 = arith.constant 0 : index
    %118 = vector.load %arg11[%117, %c0_36] : memref<8x128xf32, #tpu.memory_space<vmem>>, vector<1x128xf32>
    %cst_37 = arith.constant dense<0.000000e+00> : vector<1x128xf32>
    %119 = tpu.matmul %114, %9, %cst_37 {dimension_numbers = #tpu.dot_dimension_numbers<[1], [0], [0], [1], [0, 0, 1, 1], [], []>} : vector<1x32xf32>, vector<32x128xf32>, vector<1x128xf32> -> vector<1x128xf32>
    %120 = arith.addf %118, %119 : vector<1x128xf32>
    %121 = arith.negf %120 : vector<1x128xf32>
    %122 = math.exp %121 : vector<1x128xf32>
    %cst_38 = arith.constant 1.000000e+00 : f32
    %123 = vector.broadcast %cst_38 : f32 to vector<1x128xf32>
    %124 = arith.addf %123, %122 : vector<1x128xf32>
    %125 = arith.divf %123, %124 : vector<1x128xf32>
    %126 = vector.extract_strided_slice %125 {offsets = [0, 0], sizes = [1, 32], strides = [1, 1]} : vector<1x128xf32> to vector<1x32xf32>
    %127 = vector.extract_strided_slice %125 {offsets = [0, 32], sizes = [1, 32], strides = [1, 1]} : vector<1x128xf32> to vector<1x32xf32>
    %128 = vector.extract_strided_slice %125 {offsets = [0, 96], sizes = [1, 32], strides = [1, 1]} : vector<1x128xf32> to vector<1x32xf32>
    %129 = vector.extract_strided_slice %120 {offsets = [0, 64], sizes = [1, 32], strides = [1, 1]} : vector<1x128xf32> to vector<1x32xf32>
    %130 = math.tanh %129 : vector<1x32xf32>
    %131 = arith.mulf %127, %112 : vector<1x32xf32>
    %132 = arith.mulf %126, %130 : vector<1x32xf32>
    %133 = arith.addf %131, %132 : vector<1x32xf32>
    %134 = math.tanh %133 : vector<1x32xf32>
    %135 = arith.mulf %128, %134 : vector<1x32xf32>
    %136 = arith.index_cast %c5_i32 : i32 to index
    %c0_39 = arith.constant 0 : index
    %137 = vector.load %arg12[%136, %c0_39] : memref<128x32xf32, #tpu.memory_space<vmem>>, vector<1x32xf32>
    tpu.vector_store %arg12[%136, %c0_39], %135 {strides = array<i32>} : memref<128x32xf32, #tpu.memory_space<vmem>>, vector<1x32xf32>,
    %c6_i32 = arith.constant 6 : i32
    %138 = arith.index_cast %c6_i32 : i32 to index
    %c0_40 = arith.constant 0 : index
    %139 = vector.load %arg11[%138, %c0_40] : memref<8x128xf32, #tpu.memory_space<vmem>>, vector<1x128xf32>
    %cst_41 = arith.constant dense<0.000000e+00> : vector<1x128xf32>
    %140 = tpu.matmul %135, %9, %cst_41 {dimension_numbers = #tpu.dot_dimension_numbers<[1], [0], [0], [1], [0, 0, 1, 1], [], []>} : vector<1x32xf32>, vector<32x128xf32>, vector<1x128xf32> -> vector<1x128xf32>
    %141 = arith.addf %139, %140 : vector<1x128xf32>
    %142 = arith.negf %141 : vector<1x128xf32>
    %143 = math.exp %142 : vector<1x128xf32>
    %cst_42 = arith.constant 1.000000e+00 : f32
    %144 = vector.broadcast %cst_42 : f32 to vector<1x128xf32>
    %145 = arith.addf %144, %143 : vector<1x128xf32>
    %146 = arith.divf %144, %145 : vector<1x128xf32>
    %147 = vector.extract_strided_slice %146 {offsets = [0, 0], sizes = [1, 32], strides = [1, 1]} : vector<1x128xf32> to vector<1x32xf32>
    %148 = vector.extract_strided_slice %146 {offsets = [0, 32], sizes = [1, 32], strides = [1, 1]} : vector<1x128xf32> to vector<1x32xf32>
    %149 = vector.extract_strided_slice %146 {offsets = [0, 96], sizes = [1, 32], strides = [1, 1]} : vector<1x128xf32> to vector<1x32xf32>
    %150 = vector.extract_strided_slice %141 {offsets = [0, 64], sizes = [1, 32], strides = [1, 1]} : vector<1x128xf32> to vector<1x32xf32>
    %151 = math.tanh %150 : vector<1x32xf32>
    %152 = arith.mulf %148, %133 : vector<1x32xf32>
    %153 = arith.mulf %147, %151 : vector<1x32xf32>
    %154 = arith.addf %152, %153 : vector<1x32xf32>
    %155 = math.tanh %154 : vector<1x32xf32>
    %156 = arith.mulf %149, %155 : vector<1x32xf32>
    %157 = arith.index_cast %c6_i32 : i32 to index
    %c0_43 = arith.constant 0 : index
    %158 = vector.load %arg12[%157, %c0_43] : memref<128x32xf32, #tpu.memory_space<vmem>>, vector<1x32xf32>
    tpu.vector_store %arg12[%157, %c0_43], %156 {strides = array<i32>} : memref<128x32xf32, #tpu.memory_space<vmem>>, vector<1x32xf32>,
    %c7_i32 = arith.constant 7 : i32
    %159 = arith.index_cast %c7_i32 : i32 to index
    %c0_44 = arith.constant 0 : index
    %160 = vector.load %arg11[%159, %c0_44] : memref<8x128xf32, #tpu.memory_space<vmem>>, vector<1x128xf32>
    %cst_45 = arith.constant dense<0.000000e+00> : vector<1x128xf32>
    %161 = tpu.matmul %156, %9, %cst_45 {dimension_numbers = #tpu.dot_dimension_numbers<[1], [0], [0], [1], [0, 0, 1, 1], [], []>} : vector<1x32xf32>, vector<32x128xf32>, vector<1x128xf32> -> vector<1x128xf32>
    %162 = arith.addf %160, %161 : vector<1x128xf32>
    %163 = arith.negf %162 : vector<1x128xf32>
    %164 = math.exp %163 : vector<1x128xf32>
    %cst_46 = arith.constant 1.000000e+00 : f32
    %165 = vector.broadcast %cst_46 : f32 to vector<1x128xf32>
    %166 = arith.addf %165, %164 : vector<1x128xf32>
    %167 = arith.divf %165, %166 : vector<1x128xf32>
    %168 = vector.extract_strided_slice %167 {offsets = [0, 0], sizes = [1, 32], strides = [1, 1]} : vector<1x128xf32> to vector<1x32xf32>
    %169 = vector.extract_strided_slice %167 {offsets = [0, 32], sizes = [1, 32], strides = [1, 1]} : vector<1x128xf32> to vector<1x32xf32>
    %170 = vector.extract_strided_slice %167 {offsets = [0, 96], sizes = [1, 32], strides = [1, 1]} : vector<1x128xf32> to vector<1x32xf32>
    %171 = vector.extract_strided_slice %162 {offsets = [0, 64], sizes = [1, 32], strides = [1, 1]} : vector<1x128xf32> to vector<1x32xf32>
    %172 = math.tanh %171 : vector<1x32xf32>
    %173 = arith.mulf %169, %154 : vector<1x32xf32>
    %174 = arith.mulf %168, %172 : vector<1x32xf32>
    %175 = arith.addf %173, %174 : vector<1x32xf32>
    %176 = math.tanh %175 : vector<1x32xf32>
    %177 = arith.mulf %170, %176 : vector<1x32xf32>
    %178 = arith.index_cast %c7_i32 : i32 to index
    %c0_47 = arith.constant 0 : index
    %179 = vector.load %arg12[%178, %c0_47] : memref<128x32xf32, #tpu.memory_space<vmem>>, vector<1x32xf32>
    tpu.vector_store %arg12[%178, %c0_47], %177 {strides = array<i32>} : memref<128x32xf32, #tpu.memory_space<vmem>>, vector<1x32xf32>,
    %c8_i32 = arith.constant 8 : i32
    %c0_48 = arith.constant 0 : index
    %c0_49 = arith.constant 0 : index
    %180 = vector.load %arg12[%c0_48, %c0_49] : memref<128x32xf32, #tpu.memory_space<vmem>>, vector<128x32xf32>
    %c0_50 = arith.constant 0 : index
    %c0_51 = arith.constant 0 : index
    %181 = vector.load %arg6[%c0_50, %c0_51] : memref<32x1xf32, #tpu.memory_space<vmem>>, vector<32x1xf32>
    %cst_52 = arith.constant dense<0.000000e+00> : vector<128x1xf32>
    %182 = tpu.matmul %180, %181, %cst_52 {dimension_numbers = #tpu.dot_dimension_numbers<[1], [0], [0], [1], [0, 0, 1, 1], [], []>} : vector<128x32xf32>, vector<32x1xf32>, vector<128x1xf32> -> vector<128x1xf32>
    %c0_53 = arith.constant 0 : index
    %c0_54 = arith.constant 0 : index
    %183 = vector.load %arg7[%c0_53, %c0_54] : memref<1x1xf32, #tpu.memory_space<vmem>>, vector<1x1xf32>
    %184 = vector.broadcast %183 : vector<1x1xf32> to vector<128x1xf32>
    %185 = arith.addf %182, %184 : vector<128x1xf32>
    %cst_55 = arith.constant 0.000000e+00 : f32
    %186 = vector.broadcast %cst_55 : f32 to vector<128x1xf32>
    %187 = arith.maximumf %185, %186 : vector<128x1xf32>
    %188 = vector.broadcast %cst_55 : f32 to vector<128x1xf32>
    %189 = arith.subf %185, %188 : vector<128x1xf32>
    %190 = arith.cmpf one, %189, %189 : vector<128x1xf32>
    %191 = vector.broadcast %cst_55 : f32 to vector<128x1xf32>
    %192 = arith.addf %185, %191 : vector<128x1xf32>
    %193 = math.absf %189 : vector<128x1xf32>
    %cst_56 = arith.constant 0.000000e+00 : f32
    %194 = vector.broadcast %cst_56 : f32 to vector<128x1xf32>
    %195 = arith.subf %194, %193 : vector<128x1xf32>
    %196 = math.exp %195 : vector<128x1xf32>
    %197 = math.log1p %196 : vector<128x1xf32>
    %198 = arith.addf %187, %197 : vector<128x1xf32>
    %199 = arith.select %190, %192, %198 : vector<128x1xi1>, vector<128x1xf32>
    %c0_57 = arith.constant 0 : index
    %c0_58 = arith.constant 0 : index
    %200 = vector.load %arg8[%c0_57, %c0_58] : memref<128x1xf32, #tpu.memory_space<vmem>>, vector<128x1xf32>
    tpu.vector_store %arg8[%c0_57, %c0_58], %199 {strides = array<i32>} : memref<128x1xf32, #tpu.memory_space<vmem>>, vector<128x1xf32>,
    %c0_59 = arith.constant 0 : index
    %c0_60 = arith.constant 0 : index
    %201 = vector.load %arg9[%c0_59, %c0_60] : memref<1x32xf32, #tpu.memory_space<vmem>>, vector<1x32xf32>
    tpu.vector_store %arg9[%c0_59, %c0_60], %177 {strides = array<i32>} : memref<1x32xf32, #tpu.memory_space<vmem>>, vector<1x32xf32>,
    %c0_61 = arith.constant 0 : index
    %c0_62 = arith.constant 0 : index
    %202 = vector.load %arg10[%c0_61, %c0_62] : memref<1x32xf32, #tpu.memory_space<vmem>>, vector<1x32xf32>
    tpu.vector_store %arg10[%c0_61, %c0_62], %175 {strides = array<i32>} : memref<1x32xf32, #tpu.memory_space<vmem>>, vector<1x32xf32>,
    return
  }
}

</mosaic_0001>

<llo_original>
// kernel: lstm_decision_rollout.1
$region0: #{lstm_decision_rollout.1}
  #allocation0 [shape = 'u32[]', space=smem, size = 0x4, offset = 0x4, fixed_abs, tag = 'smem constant byte address 0x4 - core index']
  #allocation1 [shape = 'u32[144,128]{1,0:T(1,128)}', space=vmem, size = 0x12000, scoped, tag = 'internal scratch']
  #allocation2 [shape = 'f32[8,128]{1,0:T(8,128)}', space=vmem, size = 0x1000, scoped, tag = 'scratch operand']
  #allocation3 [shape = 'f32[128,32]{1,0:T(8,128)}', space=vmem, size = 0x10000, scoped, tag = 'scratch operand']
  #allocation4 [shape = 'f32[1,1]{1,0:T(1,128)S(1)}', space=vmem, size = 0x200, scoped, tag = 'scoped memory for lstm_decision_rollout.1']
  %s0 = inlined_call_operand.vmem [shape: f32[8,8], index: 0, kind: input, shape index: {}]
  %s1 = inlined_call_operand.vmem [shape: f32[1,32], index: 1, kind: input, shape index: {}]
  %s2 = inlined_call_operand.vmem [shape: f32[1,32], index: 2, kind: input, shape index: {}]
  %s3 = inlined_call_operand.vmem [shape: f32[8,128], index: 3, kind: input, shape index: {}]
  %s4 = inlined_call_operand.vmem [shape: f32[32,128], index: 4, kind: input, shape index: {}]
  %s5 = inlined_call_operand.vmem [shape: f32[1,128], index: 5, kind: input, shape index: {}]
  %s6 = inlined_call_operand.vmem [shape: f32[32,1], index: 6, kind: input, shape index: {}]
  %s7 = inlined_call_operand.<no memory space> [shape: f32[1,1], index: 7, kind: input, shape index: {}]
  %s8 = inlined_call_operand.vmem [shape: f32[128,1], index: 8, kind: output, shape index: {0}]
  %s9 = inlined_call_operand.hbm [shape: f32[1,32], index: 9, kind: output, shape index: {1}]
  %s10 = inlined_call_operand.hbm [shape: f32[1,32], index: 10, kind: output, shape index: {2}]
  %11 = xla_tuple %s8, %s9, %s10
  %s12 = sld [smem:[#allocation0]]
  $region58: #{lstm_decision_rollout.1} parent=0
    _
  %s14 = ssub.s32 1, %s12
  %s15 = scalar_select 0, %s14, %s12
  %v16 = vstv %s7
  %17 = vst [vmem:[#allocation4] sm:$0x1] %v16
  $region1: #{lstm_decision_rollout.1} parent=0
    #allocation5 [shape = 'u8[512]{0}', space=vmem, size = 0x400, scoped, tag = 'output window, operand 1, single buffered']
    #allocation6 [shape = 's32[1]{0}', space=sflag, size = 0x4, scoped, tag = 'scoped memory for lstm_decision_rollout.1']
    #allocation7 [shape = 'u8[512]{0}', space=vmem, size = 0x400, scoped, tag = 'output window, operand 2, single buffered']
    #allocation8 [shape = 's32[1]{0}', space=sflag, size = 0x4, scoped, tag = 'scoped memory for lstm_decision_rollout.1']
    %18 = vsyncpa [#allocation6], 0
    %19 = vsyncpa [#allocation8], 0
    // Predicated region
    $region2: #{lstm_decision_rollout.1} parent=1 // pred_check
      _
    $region3: #{lstm_decision_rollout.1} parent=1 // pred_check_branch
      %21 = sbr.rel (0) target = $region5
    $region4: #{lstm_decision_rollout.1} parent=1 // pred_region
      _
    $region5: #{lstm_decision_rollout.1} parent=1 // pred_fallthru
      _
    // Predicated region
    $region6: #{lstm_decision_rollout.1} parent=1 // pred_check
      _
    $region7: #{lstm_decision_rollout.1} parent=1 // pred_check_branch
      %23 = sbr.rel (0) target = $region9
    $region8: #{lstm_decision_rollout.1} parent=1 // pred_region
      _
    $region9: #{lstm_decision_rollout.1} parent=1 // pred_fallthru
      _
    // Predicated region
    $region10: #{lstm_decision_rollout.1} parent=1 // pred_check
      _
    $region11: #{lstm_decision_rollout.1} parent=1 // pred_check_branch
      %25 = sbr.rel (0) target = $region13
    $region12: #{lstm_decision_rollout.1} parent=1 // pred_region
      _
    $region13: #{lstm_decision_rollout.1} parent=1 // pred_fallthru
      _
    // Predicated region
    $region14: #{lstm_decision_rollout.1} parent=1 // pred_check
      _
    $region15: #{lstm_decision_rollout.1} parent=1 // pred_check_branch
      %27 = sbr.rel (0) target = $region17
    $region16: #{lstm_decision_rollout.1} parent=1 // pred_region
      _
    $region17: #{lstm_decision_rollout.1} parent=1 // pred_fallthru
      _
    // Predicated region
    $region18: #{lstm_decision_rollout.1} parent=1 // pred_check
      _
    $region19: #{lstm_decision_rollout.1} parent=1 // pred_check_branch
      %29 = sbr.rel (0) target = $region21
    $region20: #{lstm_decision_rollout.1} parent=1 // pred_region
      _
    $region21: #{lstm_decision_rollout.1} parent=1 // pred_fallthru
      _
    // Predicated region
    $region22: #{lstm_decision_rollout.1} parent=1 // pred_check
      _
    $region23: #{lstm_decision_rollout.1} parent=1 // pred_check_branch
      %31 = sbr.rel (0) target = $region25
    $region24: #{lstm_decision_rollout.1} parent=1 // pred_region
      _
    $region25: #{lstm_decision_rollout.1} parent=1 // pred_fallthru
      _
    // Predicated region
    $region26: #{lstm_decision_rollout.1} parent=1 // pred_check
      _
    $region27: #{lstm_decision_rollout.1} parent=1 // pred_check_branch
      %33 = sbr.rel (0) target = $region29
    $region28: #{lstm_decision_rollout.1} parent=1 // pred_region
      _
    $region29: #{lstm_decision_rollout.1} parent=1 // pred_fallthru
      _
    // Predicated region
    $region30: #{lstm_decision_rollout.1} parent=1 // pred_check
      _
    $region31: #{lstm_decision_rollout.1} parent=1 // pred_check_branch
      %35 = sbr.rel (0) target = $region33
    $region32: #{lstm_decision_rollout.1} parent=1 // pred_region
      _
    $region33: #{lstm_decision_rollout.1} parent=1 // pred_fallthru
      _
    %v36 = vld [vmem:[%s0] sm:$0xff]
    %v37 = vld [vmem:[%s3] sm:$0xff]
    %v38 = vld [vmem:[%s5] sm:$0x1]
    %v40 = vlaneseq
    %v41 = vshrl.u32 %v40, 7
    %v42 = vsub.s32 0, %v41
    %v43 = vrot.slane %v38, %v42
    %vm45 = vcmask 64512
    %v47 = vsel %vm45, %v36, 0
    %49 = vmatprep.subr.mxu0 0.0
    %50 = vmatpush1.msra.mxu0 %v37
    %51 = vmatprep.subr.mxu0 0.0
    %52 = vmatpush1.msra.mxu0 0.0
    %53 = vmatprep.subr.mxu0 0.0
    %54 = vmatpush1.msra.mxu0 0.0
    %55 = vmatprep.subr.mxu0 0.0
    %56 = vmatpush1.msra.mxu0 0.0
    %57 = vmatprep.subr.mxu0 0.0
    %58 = vmatpush1.msra.mxu0 0.0
    %59 = vmatprep.subr.mxu0 0.0
    %60 = vmatpush1.msra.mxu0 0.0
    %61 = vmatprep.subr.mxu0 0.0
    %62 = vmatpush1.msra.mxu0 0.0
    %63 = vmatprep.subr.mxu0 0.0
    %64 = vmatpush1.msra.mxu0 0.0
    %65 = vmatprep.subr.mxu0 0.0
    %66 = vmatpush1.msra.mxu0 0.0
    %67 = vmatprep.subr.mxu0 0.0
    %68 = vmatpush1.msra.mxu0 0.0
    %69 = vmatprep.subr.mxu0 0.0
    %70 = vmatpush1.msra.mxu0 0.0
    %71 = vmatprep.subr.mxu0 0.0
    %72 = vmatpush1.msra.mxu0 0.0
    %73 = vmatprep.subr.mxu0 0.0
    %74 = vmatpush1.msra.mxu0 0.0
    %75 = vmatprep.subr.mxu0 0.0
    %76 = vmatpush1.msra.mxu0 0.0
    %77 = vmatprep.subr.mxu0 0.0
    %78 = vmatpush1.msra.mxu0 0.0
    %79 = vmatprep.subr.mxu0 0.0
    %80 = vmatpush1.msra.mxu0 0.0
    %81 = vmatprep.subr.mxu0 0.0
    %82 = vmatpush1.msra.mxu0 0.0
    %83 = vmatprep.subr.mxu0 0.0
    %84 = vmatpush1.msra.mxu0 0.0
    %85 = vmatprep.subr.mxu0 0.0
    %86 = vmatpush1.msra.mxu0 0.0
    %87 = vmatprep.subr.mxu0 0.0
    %88 = vmatpush1.msra.mxu0 0.0
    %89 = vmatprep.subr.mxu0 0.0
    %90 = vmatpush1.msra.mxu0 0.0
    %91 = vmatprep.subr.mxu0 0.0
    %92 = vmatpush1.msra.mxu0 0.0
    %93 = vmatprep.subr.mxu0 0.0
    %94 = vmatpush1.msra.mxu0 0.0
    %95 = vmatprep.subr.mxu0 0.0
    %96 = vmatpush1.msra.mxu0 0.0
    %97 = vmatprep.subr.mxu0 0.0
    %98 = vmatpush1.msra.mxu0 0.0
    %99 = vmatprep.subr.mxu0 0.0
    %100 = vmatpush1.msra.mxu0 0.0
    %101 = vmatprep.subr.mxu0 0.0
    %102 = vmatpush1.msra.mxu0 0.0
    %103 = vmatprep.subr.mxu0 0.0
    %104 = vmatpush1.msra.mxu0 0.0
    %105 = vmatprep.subr.mxu0 0.0
    %106 = vmatpush1.msra.mxu0 0.0
    %107 = vmatprep.subr.mxu0 0.0
    %108 = vmatpush1.msra.mxu0 0.0
    %109 = vmatprep.subr.mxu0 0.0
    %110 = vmatpush1.msra.mxu0 0.0
    %111 = vmatprep.subr.mxu0 0.0
    %112 = vmatpush1.msra.mxu0 0.0
    %113 = vmatprep.mubr.f32.mxu0 0.0
    %114 = vmatmul.mubr.f32.gmra.mrb[0].mxu0 %v47
    %v115 = vpop.f32.mrb[0].mxu0
    %v116 = vadd.f32 %v43, %v115
    %v117 = vpop.f32.mrb[0].mxu0
    %118 = vdwg.mxu0
    %119 = vst [vmem:[#allocation2] sm:$0xff] %v116
    %vm120 = vcmask 261120
    %121 = vst.msk [vmem:[#allocation3] sm:$0xff] %vm120, 0.0
    %122 = vst.msk [vmem:[#allocation3 + $0x8] sm:$0xff] %vm120, 0.0
    %123 = vst.msk [vmem:[#allocation3 + $0x10] sm:$0xff] %vm120, 0.0
    %124 = vst.msk [vmem:[#allocation3 + $0x18] sm:$0xff] %vm120, 0.0
    %125 = vst.msk [vmem:[#allocation3 + $0x20] sm:$0xff] %vm120, 0.0
    %126 = vst.msk [vmem:[#allocation3 + $0x28] sm:$0xff] %vm120, 0.0
    %127 = vst.msk [vmem:[#allocation3 + $0x30] sm:$0xff] %vm120, 0.0
    %128 = vst.msk [vmem:[#allocation3 + $0x38] sm:$0xff] %vm120, 0.0
    %129 = vst.msk [vmem:[#allocation3 + $0x40] sm:$0xff] %vm120, 0.0
    %130 = vst.msk [vmem:[#allocation3 + $0x48] sm:$0xff] %vm120, 0.0
    %131 = vst.msk [vmem:[#allocation3 + $0x50] sm:$0xff] %vm120, 0.0
    %132 = vst.msk [vmem:[#allocation3 + $0x58] sm:$0xff] %vm120, 0.0
    %133 = vst.msk [vmem:[#allocation3 + $0x60] sm:$0xff] %vm120, 0.0
    %134 = vst.msk [vmem:[#allocation3 + $0x68] sm:$0xff] %vm120, 0.0
    %135 = vst.msk [vmem:[#allocation3 + $0x70] sm:$0xff] %vm120, 0.0
    %136 = vst.msk [vmem:[#allocation3 + $0x78] sm:$0xff] %vm120, 0.0
    %v137 = vld [vmem:[%s4] sm:$0xff]
    %v138 = vld [vmem:[%s4 + $0x8] sm:$0xff]
    %v139 = vld [vmem:[%s4 + $0x10] sm:$0xff]
    %v140 = vld [vmem:[%s4 + $0x18] sm:$0xff]
    %v141 = vld [vmem:[%s1] sm:$0x1]
    %v142 = vld [vmem:[%s2] sm:$0x1]
    %v143 = vld [vmem:[#allocation2] sm:$0x1]
    %v145 = vsel %vm120, %v141, 0
    %147 = vmatprep.subr.mxu0 0.0
    %148 = vmatpush1.msra.mxu0 %v137
    %149 = vmatprep.subr.mxu0 0.0
    %150 = vmatpush1.msra.mxu0 %v138
    %151 = vmatprep.subr.mxu0 0.0
    %152 = vmatpush1.msra.mxu0 %v139
    %153 = vmatprep.subr.mxu0 0.0
    %154 = vmatpush1.msra.mxu0 %v140
    %155 = vmatprep.subr.mxu0 0.0
    %156 = vmatpush1.msra.mxu0 0.0
    %157 = vmatprep.subr.mxu0 0.0
    %158 = vmatpush1.msra.mxu0 0.0
    %159 = vmatprep.subr.mxu0 0.0
    %160 = vmatpush1.msra.mxu0 0.0
    %161 = vmatprep.subr.mxu0 0.0
    %162 = vmatpush1.msra.mxu0 0.0
    %163 = vmatprep.subr.mxu0 0.0
    %164 = vmatpush1.msra.mxu0 0.0
    %165 = vmatprep.subr.mxu0 0.0
    %166 = vmatpush1.msra.mxu0 0.0
    %167 = vmatprep.subr.mxu0 0.0
    %168 = vmatpush1.msra.mxu0 0.0
    %169 = vmatprep.subr.mxu0 0.0
    %170 = vmatpush1.msra.mxu0 0.0
    %171 = vmatprep.subr.mxu0 0.0
    %172 = vmatpush1.msra.mxu0 0.0
    %173 = vmatprep.subr.mxu0 0.0
    %174 = vmatpush1.msra.mxu0 0.0
    %175 = vmatprep.subr.mxu0 0.0
    %176 = vmatpush1.msra.mxu0 0.0
    %177 = vmatprep.subr.mxu0 0.0
    %178 = vmatpush1.msra.mxu0 0.0
    %179 = vmatprep.subr.mxu0 0.0
    %180 = vmatpush1.msra.mxu0 0.0
    %181 = vmatprep.subr.mxu0 0.0
    %182 = vmatpush1.msra.mxu0 0.0
    %183 = vmatprep.subr.mxu0 0.0
    %184 = vmatpush1.msra.mxu0 0.0
    %185 = vmatprep.subr.mxu0 0.0
    %186 = vmatpush1.msra.mxu0 0.0
    %187 = vmatprep.subr.mxu0 0.0
    %188 = vmatpush1.msra.mxu0 0.0
    %189 = vmatprep.subr.mxu0 0.0
    %190 = vmatpush1.msra.mxu0 0.0
    %191 = vmatprep.subr.mxu0 0.0
    %192 = vmatpush1.msra.mxu0 0.0
    %193 = vmatprep.subr.mxu0 0.0
    %194 = vmatpush1.msra.mxu0 0.0
    %195 = vmatprep.subr.mxu0 0.0
    %196 = vmatpush1.msra.mxu0 0.0
    %197 = vmatprep.subr.mxu0 0.0
    %198 = vmatpush1.msra.mxu0 0.0
    %199 = vmatprep.subr.mxu0 0.0
    %200 = vmatpush1.msra.mxu0 0.0
    %201 = vmatprep.subr.mxu0 0.0
    %202 = vmatpush1.msra.mxu0 0.0
    %203 = vmatprep.subr.mxu0 0.0
    %204 = vmatpush1.msra.mxu0 0.0
    %205 = vmatprep.subr.mxu0 0.0
    %206 = vmatpush1.msra.mxu0 0.0
    %207 = vmatprep.subr.mxu0 0.0
    %208 = vmatpush1.msra.mxu0 0.0
    %209 = vmatprep.subr.mxu0 0.0
    %210 = vmatpush1.msra.mxu0 0.0
    %211 = vmatprep.mubr.f32.mxu0 0.0
    %212 = vmatmul.mubr.f32.gmra.mrb[0].mxu0 %v145
    %v213 = vpop.f32.mrb[0].mxu0
    %v214 = vadd.f32 0.0, %v213
    %v215 = vpop.f32.mrb[0].mxu0
    %216 = vdwg.mxu0
    %v217 = vadd.f32 %v143, %v214
    %v218 = vxor.u32 %v217, 2147483648
    %v219 = vmul.f32 %v218, 1.442695
    %v220 = vpow.pop %v219
    %v221 = vadd.f32 %v220, 1.0
    %v222 = vrcp.pop %v221
    %v223 = vmul.f32 1.0, %v222
    %v224 = vtanh.pop %v217
    %v226 = vlaneseq
    %v227 = vshrl.u32 %v226, 7
    %v228 = vsub.s32 0, %v227
    %v229 = vrot.slane %v142, %v228
    %230 = vrot.lane.b32.xlu0 %v229, 32
    %v231 = vpop.permute.xlu0 %230
    %v233 = vmul.f32 %v223, %v231
    %235 = vrot.lane.b32.xlu0 %v224, 64
    %v236 = vpop.permute.xlu0 %235
    %v238 = vmul.f32 %v223, %v236
    %240 = vrot.lane.b32.xlu0 %v238, 32
    %v241 = vpop.permute.xlu0 %240
    %v243 = vadd.f32 %v233, %v241
    %v244 = vtanh.pop %v243
    %246 = vrot.lane.b32.xlu0 %v244, 64
    %v247 = vpop.permute.xlu0 %246
    %v249 = vmul.f32 %v223, %v247
    %251 = vrot.lane.b32.xlu0 %v249, 32
    %v252 = vpop.permute.xlu0 %251
    %vm254 = vcmask 253952
    %255 = vst.msk [vmem:[#allocation3] sm:$0x1] %vm254, %v252
    %v256 = vld [vmem:[#allocation2 + $0x1] sm:$0x1]
    %v257 = vsel %vm120, %v252, 0
    %259 = vmatprep.subr.mxu0 0.0
    %260 = vmatpush1.msra.mxu0 %v137
    %261 = vmatprep.subr.mxu0 0.0
    %262 = vmatpush1.msra.mxu0 %v138
    %263 = vmatprep.subr.mxu0 0.0
    %264 = vmatpush1.msra.mxu0 %v139
    %265 = vmatprep.subr.mxu0 0.0
    %266 = vmatpush1.msra.mxu0 %v140
    %267 = vmatprep.subr.mxu0 0.0
    %268 = vmatpush1.msra.mxu0 0.0
    %269 = vmatprep.subr.mxu0 0.0
    %270 = vmatpush1.msra.mxu0 0.0
    %271 = vmatprep.subr.mxu0 0.0
    %272 = vmatpush1.msra.mxu0 0.0
    %273 = vmatprep.subr.mxu0 0.0
    %274 = vmatpush1.msra.mxu0 0.0
    %275 = vmatprep.subr.mxu0 0.0
    %276 = vmatpush1.msra.mxu0 0.0
    %277 = vmatprep.subr.mxu0 0.0
    %278 = vmatpush1.msra.mxu0 0.0
    %279 = vmatprep.subr.mxu0 0.0
    %280 = vmatpush1.msra.mxu0 0.0
    %281 = vmatprep.subr.mxu0 0.0
    %282 = vmatpush1.msra.mxu0 0.0
    %283 = vmatprep.subr.mxu0 0.0
    %284 = vmatpush1.msra.mxu0 0.0
    %285 = vmatprep.subr.mxu0 0.0
    %286 = vmatpush1.msra.mxu0 0.0
    %287 = vmatprep.subr.mxu0 0.0
    %288 = vmatpush1.msra.mxu0 0.0
    %289 = vmatprep.subr.mxu0 0.0
    %290 = vmatpush1.msra.mxu0 0.0
    %291 = vmatprep.subr.mxu0 0.0
    %292 = vmatpush1.msra.mxu0 0.0
    %293 = vmatprep.subr.mxu0 0.0
    %294 = vmatpush1.msra.mxu0 0.0
    %295 = vmatprep.subr.mxu0 0.0
    %296 = vmatpush1.msra.mxu0 0.0
    %297 = vmatprep.subr.mxu0 0.0
    %298 = vmatpush1.msra.mxu0 0.0
    %299 = vmatprep.subr.mxu0 0.0
    %300 = vmatpush1.msra.mxu0 0.0
    %301 = vmatprep.subr.mxu0 0.0
    %302 = vmatpush1.msra.mxu0 0.0
    %303 = vmatprep.subr.mxu0 0.0
    %304 = vmatpush1.msra.mxu0 0.0
    %305 = vmatprep.subr.mxu0 0.0
    %306 = vmatpush1.msra.mxu0 0.0
    %307 = vmatprep.subr.mxu0 0.0
    %308 = vmatpush1.msra.mxu0 0.0
    %309 = vmatprep.subr.mxu0 0.0
    %310 = vmatpush1.msra.mxu0 0.0
    %311 = vmatprep.subr.mxu0 0.0
    %312 = vmatpush1.msra.mxu0 0.0
    %313 = vmatprep.subr.mxu0 0.0
    %314 = vmatpush1.msra.mxu0 0.0
    %315 = vmatprep.subr.mxu0 0.0
    %316 = vmatpush1.msra.mxu0 0.0
    %317 = vmatprep.subr.mxu0 0.0
    %318 = vmatpush1.msra.mxu0 0.0
    %319 = vmatprep.subr.mxu0 0.0
    %320 = vmatpush1.msra.mxu0 0.0
    %321 = vmatprep.subr.mxu0 0.0
    %322 = vmatpush1.msra.mxu0 0.0
    %323 = vmatprep.mubr.f32.mxu0 0.0
    %324 = vmatmul.mubr.f32.gmra.mrb[0].mxu0 %v257
    %v325 = vpop.f32.mrb[0].mxu0
    %v326 = vadd.f32 0.0, %v325
    %v327 = vpop.f32.mrb[0].mxu0
    %328 = vdwg.mxu0
    %v329 = vadd.f32 %v256, %v326
    %v330 = vxor.u32 %v329, 2147483648
    %v331 = vmul.f32 %v330, 1.442695
    %v332 = vpow.pop %v331
    %v333 = vadd.f32 %v332, 1.0
    %v334 = vrcp.pop %v333
    %v335 = vmul.f32 1.0, %v334
    %v336 = vtanh.pop %v329
    %v337 = vmul.f32 %v335, %v243
    %339 = vrot.lane.b32.xlu0 %v336, 64
    %v340 = vpop.permute.xlu0 %339
    %v342 = vmul.f32 %v335, %v340
    %344 = vrot.lane.b32.xlu0 %v342, 32
    %v345 = vpop.permute.xlu0 %344
    %v347 = vadd.f32 %v337, %v345
    %v348 = vtanh.pop %v347
    %350 = vrot.lane.b32.xlu0 %v348, 64
    %v351 = vpop.permute.xlu0 %350
    %v353 = vmul.f32 %v335, %v351
    %355 = vrot.lane.b32.xlu0 %v353, 32
    %v356 = vpop.permute.xlu0 %355
    %358 = vst.msk [vmem:[#allocation3 + $0x1] sm:$0x1] %vm254, %v356
    %v359 = vld [vmem:[#allocation2 + $0x2] sm:$0x1]
    %v360 = vsel %vm120, %v356, 0
    %362 = vmatprep.subr.mxu0 0.0
    %363 = vmatpush1.msra.mxu0 %v137
    %364 = vmatprep.subr.mxu0 0.0
    %365 = vmatpush1.msra.mxu0 %v138
    %366 = vmatprep.subr.mxu0 0.0
    %367 = vmatpush1.msra.mxu0 %v139
    %368 = vmatprep.subr.mxu0 0.0
    %369 = vmatpush1.msra.mxu0 %v140
    %370 = vmatprep.subr.mxu0 0.0
    %371 = vmatpush1.msra.mxu0 0.0
    %372 = vmatprep.subr.mxu0 0.0
    %373 = vmatpush1.msra.mxu0 0.0
    %374 = vmatprep.subr.mxu0 0.0
    %375 = vmatpush1.msra.mxu0 0.0
    %376 = vmatprep.subr.mxu0 0.0
    %377 = vmatpush1.msra.mxu0 0.0
    %378 = vmatprep.subr.mxu0 0.0
    %379 = vmatpush1.msra.mxu0 0.0
    %380 = vmatprep.subr.mxu0 0.0
    %381 = vmatpush1.msra.mxu0 0.0
    %382 = vmatprep.subr.mxu0 0.0
    %383 = vmatpush1.msra.mxu0 0.0
    %384 = vmatprep.subr.mxu0 0.0
    %385 = vmatpush1.msra.mxu0 0.0
    %386 = vmatprep.subr.mxu0 0.0
    %387 = vmatpush1.msra.mxu0 0.0
    %388 = vmatprep.subr.mxu0 0.0
    %389 = vmatpush1.msra.mxu0 0.0
    %390 = vmatprep.subr.mxu0 0.0
    %391 = vmatpush1.msra.mxu0 0.0
    %392 = vmatprep.subr.mxu0 0.0
    %393 = vmatpush1.msra.mxu0 0.0
    %394 = vmatprep.subr.mxu0 0.0
    %395 = vmatpush1.msra.mxu0 0.0
    %396 = vmatprep.subr.mxu0 0.0
    %397 = vmatpush1.msra.mxu0 0.0
    %398 = vmatprep.subr.mxu0 0.0
    %399 = vmatpush1.msra.mxu0 0.0
    %400 = vmatprep.subr.mxu0 0.0
    %401 = vmatpush1.msra.mxu0 0.0
    %402 = vmatprep.subr.mxu0 0.0
    %403 = vmatpush1.msra.mxu0 0.0
    %404 = vmatprep.subr.mxu0 0.0
    %405 = vmatpush1.msra.mxu0 0.0
    %406 = vmatprep.subr.mxu0 0.0
    %407 = vmatpush1.msra.mxu0 0.0
    %408 = vmatprep.subr.mxu0 0.0
    %409 = vmatpush1.msra.mxu0 0.0
    %410 = vmatprep.subr.mxu0 0.0
    %411 = vmatpush1.msra.mxu0 0.0
    %412 = vmatprep.subr.mxu0 0.0
    %413 = vmatpush1.msra.mxu0 0.0
    %414 = vmatprep.subr.mxu0 0.0
    %415 = vmatpush1.msra.mxu0 0.0
    %416 = vmatprep.subr.mxu0 0.0
    %417 = vmatpush1.msra.mxu0 0.0
    %418 = vmatprep.subr.mxu0 0.0
    %419 = vmatpush1.msra.mxu0 0.0
    %420 = vmatprep.subr.mxu0 0.0
    %421 = vmatpush1.msra.mxu0 0.0
    %422 = vmatprep.subr.mxu0 0.0
    %423 = vmatpush1.msra.mxu0 0.0
    %424 = vmatprep.subr.mxu0 0.0
    %425 = vmatpush1.msra.mxu0 0.0
    %426 = vmatprep.mubr.f32.mxu0 0.0
    %427 = vmatmul.mubr.f32.gmra.mrb[0].mxu0 %v360
    %v428 = vpop.f32.mrb[0].mxu0
    %v429 = vadd.f32 0.0, %v428
    %v430 = vpop.f32.mrb[0].mxu0
    %431 = vdwg.mxu0
    %v432 = vadd.f32 %v359, %v429
    %v433 = vxor.u32 %v432, 2147483648
    %v434 = vmul.f32 %v433, 1.442695
    %v435 = vpow.pop %v434
    %v436 = vadd.f32 %v435, 1.0
    %v437 = vrcp.pop %v436
    %v438 = vmul.f32 1.0, %v437
    %v439 = vtanh.pop %v432
    %v440 = vmul.f32 %v438, %v347
    %442 = vrot.lane.b32.xlu0 %v439, 64
    %v443 = vpop.permute.xlu0 %442
    %v445 = vmul.f32 %v438, %v443
    %447 = vrot.lane.b32.xlu0 %v445, 32
    %v448 = vpop.permute.xlu0 %447
    %v450 = vadd.f32 %v440, %v448
    %v451 = vtanh.pop %v450
    %453 = vrot.lane.b32.xlu0 %v451, 64
    %v454 = vpop.permute.xlu0 %453
    %v456 = vmul.f32 %v438, %v454
    %458 = vrot.lane.b32.xlu0 %v456, 32
    %v459 = vpop.permute.xlu0 %458
    %461 = vst.msk [vmem:[#allocation3 + $0x2] sm:$0x1] %vm254, %v459
    %v462 = vld [vmem:[#allocation2 + $0x3] sm:$0x1]
    %v463 = vsel %vm120, %v459, 0
    %465 = vmatprep.subr.mxu0 0.0
    %466 = vmatpush1.msra.mxu0 %v137
    %467 = vmatprep.subr.mxu0 0.0
    %468 = vmatpush1.msra.mxu0 %v138
    %469 = vmatprep.subr.mxu0 0.0
    %470 = vmatpush1.msra.mxu0 %v139
    %471 = vmatprep.subr.mxu0 0.0
    %472 = vmatpush1.msra.mxu0 %v140
    %473 = vmatprep.subr.mxu0 0.0
    %474 = vmatpush1.msra.mxu0 0.0
    %475 = vmatprep.subr.mxu0 0.0
    %476 = vmatpush1.msra.mxu0 0.0
    %477 = vmatprep.subr.mxu0 0.0
    %478 = vmatpush1.msra.mxu0 0.0
    %479 = vmatprep.subr.mxu0 0.0
    %480 = vmatpush1.msra.mxu0 0.0
    %481 = vmatprep.subr.mxu0 0.0
    %482 = vmatpush1.msra.mxu0 0.0
    %483 = vmatprep.subr.mxu0 0.0
    %484 = vmatpush1.msra.mxu0 0.0
    %485 = vmatprep.subr.mxu0 0.0
    %486 = vmatpush1.msra.mxu0 0.0
    %487 = vmatprep.subr.mxu0 0.0
    %488 = vmatpush1.msra.mxu0 0.0
    %489 = vmatprep.subr.mxu0 0.0
    %490 = vmatpush1.msra.mxu0 0.0
    %491 = vmatprep.subr.mxu0 0.0
    %492 = vmatpush1.msra.mxu0 0.0
    %493 = vmatprep.subr.mxu0 0.0
    %494 = vmatpush1.msra.mxu0 0.0
    %495 = vmatprep.subr.mxu0 0.0
    %496 = vmatpush1.msra.mxu0 0.0
    %497 = vmatprep.subr.mxu0 0.0
    %498 = vmatpush1.msra.mxu0 0.0
    %499 = vmatprep.subr.mxu0 0.0
    %500 = vmatpush1.msra.mxu0 0.0
    %501 = vmatprep.subr.mxu0 0.0
    %502 = vmatpush1.msra.mxu0 0.0
    %503 = vmatprep.subr.mxu0 0.0
    %504 = vmatpush1.msra.mxu0 0.0
    %505 = vmatprep.subr.mxu0 0.0
    %506 = vmatpush1.msra.mxu0 0.0
    %507 = vmatprep.subr.mxu0 0.0
    %508 = vmatpush1.msra.mxu0 0.0
    %509 = vmatprep.subr.mxu0 0.0
    %510 = vmatpush1.msra.mxu0 0.0
    %511 = vmatprep.subr.mxu0 0.0
    %512 = vmatpush1.msra.mxu0 0.0
    %513 = vmatprep.subr.mxu0 0.0
    %514 = vmatpush1.msra.mxu0 0.0
    %515 = vmatprep.subr.mxu0 0.0
    %516 = vmatpush1.msra.mxu0 0.0
    %517 = vmatprep.subr.mxu0 0.0
    %518 = vmatpush1.msra.mxu0 0.0
    %519 = vmatprep.subr.mxu0 0.0
    %520 = vmatpush1.msra.mxu0 0.0
    %521 = vmatprep.subr.mxu0 0.0
    %522 = vmatpush1.msra.mxu0 0.0
    %523 = vmatprep.subr.mxu0 0.0
    %524 = vmatpush1.msra.mxu0 0.0
    %525 = vmatprep.subr.mxu0 0.0
    %526 = vmatpush1.msra.mxu0 0.0
    %527 = vmatprep.subr.mxu0 0.0
    %528 = vmatpush1.msra.mxu0 0.0
    %529 = vmatprep.mubr.f32.mxu0 0.0
    %530 = vmatmul.mubr.f32.gmra.mrb[0].mxu0 %v463
    %v531 = vpop.f32.mrb[0].mxu0
    %v532 = vadd.f32 0.0, %v531
    %v533 = vpop.f32.mrb[0].mxu0
    %534 = vdwg.mxu0
    %v535 = vadd.f32 %v462, %v532
    %v536 = vxor.u32 %v535, 2147483648
    %v537 = vmul.f32 %v536, 1.442695
    %v538 = vpow.pop %v537
    %v539 = vadd.f32 %v538, 1.0
    %v540 = vrcp.pop %v539
    %v541 = vmul.f32 1.0, %v540
    %v542 = vtanh.pop %v535
    %v543 = vmul.f32 %v541, %v450
    %545 = vrot.lane.b32.xlu0 %v542, 64
    %v546 = vpop.permute.xlu0 %545
    %v548 = vmul.f32 %v541, %v546
    %550 = vrot.lane.b32.xlu0 %v548, 32
    %v551 = vpop.permute.xlu0 %550
    %v553 = vadd.f32 %v543, %v551
    %v554 = vtanh.pop %v553
    %556 = vrot.lane.b32.xlu0 %v554, 64
    %v557 = vpop.permute.xlu0 %556
    %v559 = vmul.f32 %v541, %v557
    %561 = vrot.lane.b32.xlu0 %v559, 32
    %v562 = vpop.permute.xlu0 %561
    %564 = vst.msk [vmem:[#allocation3 + $0x3] sm:$0x1] %vm254, %v562
    %v565 = vld [vmem:[#allocation2 + $0x4] sm:$0x1]
    %v566 = vsel %vm120, %v562, 0
    %568 = vmatprep.subr.mxu0 0.0
    %569 = vmatpush1.msra.mxu0 %v137
    %570 = vmatprep.subr.mxu0 0.0
    %571 = vmatpush1.msra.mxu0 %v138
    %572 = vmatprep.subr.mxu0 0.0
    %573 = vmatpush1.msra.mxu0 %v139
    %574 = vmatprep.subr.mxu0 0.0
    %575 = vmatpush1.msra.mxu0 %v140
    %576 = vmatprep.subr.mxu0 0.0
    %577 = vmatpush1.msra.mxu0 0.0
    %578 = vmatprep.subr.mxu0 0.0
    %579 = vmatpush1.msra.mxu0 0.0
    %580 = vmatprep.subr.mxu0 0.0
    %581 = vmatpush1.msra.mxu0 0.0
    %582 = vmatprep.subr.mxu0 0.0
    %583 = vmatpush1.msra.mxu0 0.0
    %584 = vmatprep.subr.mxu0 0.0
    %585 = vmatpush1.msra.mxu0 0.0
    %586 = vmatprep.subr.mxu0 0.0
    %587 = vmatpush1.msra.mxu0 0.0
    %588 = vmatprep.subr.mxu0 0.0
    %589 = vmatpush1.msra.mxu0 0.0
    %590 = vmatprep.subr.mxu0 0.0
    %591 = vmatpush1.msra.mxu0 0.0
    %592 = vmatprep.subr.mxu0 0.0
    %593 = vmatpush1.msra.mxu0 0.0
    %594 = vmatprep.subr.mxu0 0.0
    %595 = vmatpush1.msra.mxu0 0.0
    %596 = vmatprep.subr.mxu0 0.0
    %597 = vmatpush1.msra.mxu0 0.0
    %598 = vmatprep.subr.mxu0 0.0
    %599 = vmatpush1.msra.mxu0 0.0
    %600 = vmatprep.subr.mxu0 0.0
    %601 = vmatpush1.msra.mxu0 0.0
    %602 = vmatprep.subr.mxu0 0.0
    %603 = vmatpush1.msra.mxu0 0.0
    %604 = vmatprep.subr.mxu0 0.0
    %605 = vmatpush1.msra.mxu0 0.0
    %606 = vmatprep.subr.mxu0 0.0
    %607 = vmatpush1.msra.mxu0 0.0
    %608 = vmatprep.subr.mxu0 0.0
    %609 = vmatpush1.msra.mxu0 0.0
    %610 = vmatprep.subr.mxu0 0.0
    %611 = vmatpush1.msra.mxu0 0.0
    %612 = vmatprep.subr.mxu0 0.0
    %613 = vmatpush1.msra.mxu0 0.0
    %614 = vmatprep.subr.mxu0 0.0
    %615 = vmatpush1.msra.mxu0 0.0
    %616 = vmatprep.subr.mxu0 0.0
    %617 = vmatpush1.msra.mxu0 0.0
    %618 = vmatprep.subr.mxu0 0.0
    %619 = vmatpush1.msra.mxu0 0.0
    %620 = vmatprep.subr.mxu0 0.0
    %621 = vmatpush1.msra.mxu0 0.0
    %622 = vmatprep.subr.mxu0 0.0
    %623 = vmatpush1.msra.mxu0 0.0
    %624 = vmatprep.subr.mxu0 0.0
    %625 = vmatpush1.msra.mxu0 0.0
    %626 = vmatprep.subr.mxu0 0.0
    %627 = vmatpush1.msra.mxu0 0.0
    %628 = vmatprep.subr.mxu0 0.0
    %629 = vmatpush1.msra.mxu0 0.0
    %630 = vmatprep.subr.mxu0 0.0
    %631 = vmatpush1.msra.mxu0 0.0
    %632 = vmatprep.mubr.f32.mxu0 0.0
    %633 = vmatmul.mubr.f32.gmra.mrb[0].mxu0 %v566
    %v634 = vpop.f32.mrb[0].mxu0
    %v635 = vadd.f32 0.0, %v634
    %v636 = vpop.f32.mrb[0].mxu0
    %637 = vdwg.mxu0
    %v638 = vadd.f32 %v565, %v635
    %v639 = vxor.u32 %v638, 2147483648
    %v640 = vmul.f32 %v639, 1.442695
    %v641 = vpow.pop %v640
    %v642 = vadd.f32 %v641, 1.0
    %v643 = vrcp.pop %v642
    %v644 = vmul.f32 1.0, %v643
    %v645 = vtanh.pop %v638
    %v646 = vmul.f32 %v644, %v553
    %648 = vrot.lane.b32.xlu0 %v645, 64
    %v649 = vpop.permute.xlu0 %648
    %v651 = vmul.f32 %v644, %v649
    %653 = vrot.lane.b32.xlu0 %v651, 32
    %v654 = vpop.permute.xlu0 %653
    %v656 = vadd.f32 %v646, %v654
    %v657 = vtanh.pop %v656
    %659 = vrot.lane.b32.xlu0 %v657, 64
    %v660 = vpop.permute.xlu0 %659
    %v662 = vmul.f32 %v644, %v660
    %664 = vrot.lane.b32.xlu0 %v662, 32
    %v665 = vpop.permute.xlu0 %664
    %667 = vst.msk [vmem:[#allocation3 + $0x4] sm:$0x1] %vm254, %v665
    %v668 = vld [vmem:[#allocation2 + $0x5] sm:$0x1]
    %v669 = vsel %vm120, %v665, 0
    %671 = vmatprep.subr.mxu0 0.0
    %672 = vmatpush1.msra.mxu0 %v137
    %673 = vmatprep.subr.mxu0 0.0
    %674 = vmatpush1.msra.mxu0 %v138
    %675 = vmatprep.subr.mxu0 0.0
    %676 = vmatpush1.msra.mxu0 %v139
    %677 = vmatprep.subr.mxu0 0.0
    %678 = vmatpush1.msra.mxu0 %v140
    %679 = vmatprep.subr.mxu0 0.0
    %680 = vmatpush1.msra.mxu0 0.0
    %681 = vmatprep.subr.mxu0 0.0
    %682 = vmatpush1.msra.mxu0 0.0
    %683 = vmatprep.subr.mxu0 0.0
    %684 = vmatpush1.msra.mxu0 0.0
    %685 = vmatprep.subr.mxu0 0.0
    %686 = vmatpush1.msra.mxu0 0.0
    %687 = vmatprep.subr.mxu0 0.0
    %688 = vmatpush1.msra.mxu0 0.0
    %689 = vmatprep.subr.mxu0 0.0
    %690 = vmatpush1.msra.mxu0 0.0
    %691 = vmatprep.subr.mxu0 0.0
    %692 = vmatpush1.msra.mxu0 0.0
    %693 = vmatprep.subr.mxu0 0.0
    %694 = vmatpush1.msra.mxu0 0.0
    %695 = vmatprep.subr.mxu0 0.0
    %696 = vmatpush1.msra.mxu0 0.0
    %697 = vmatprep.subr.mxu0 0.0
    %698 = vmatpush1.msra.mxu0 0.0
    %699 = vmatprep.subr.mxu0 0.0
    %700 = vmatpush1.msra.mxu0 0.0
    %701 = vmatprep.subr.mxu0 0.0
    %702 = vmatpush1.msra.mxu0 0.0
    %703 = vmatprep.subr.mxu0 0.0
    %704 = vmatpush1.msra.mxu0 0.0
    %705 = vmatprep.subr.mxu0 0.0
    %706 = vmatpush1.msra.mxu0 0.0
    %707 = vmatprep.subr.mxu0 0.0
    %708 = vmatpush1.msra.mxu0 0.0
    %709 = vmatprep.subr.mxu0 0.0
    %710 = vmatpush1.msra.mxu0 0.0
    %711 = vmatprep.subr.mxu0 0.0
    %712 = vmatpush1.msra.mxu0 0.0
    %713 = vmatprep.subr.mxu0 0.0
    %714 = vmatpush1.msra.mxu0 0.0
    %715 = vmatprep.subr.mxu0 0.0
    %716 = vmatpush1.msra.mxu0 0.0
    %717 = vmatprep.subr.mxu0 0.0
    %718 = vmatpush1.msra.mxu0 0.0
    %719 = vmatprep.subr.mxu0 0.0
    %720 = vmatpush1.msra.mxu0 0.0
    %721 = vmatprep.subr.mxu0 0.0
    %722 = vmatpush1.msra.mxu0 0.0
    %723 = vmatprep.subr.mxu0 0.0
    %724 = vmatpush1.msra.mxu0 0.0
    %725 = vmatprep.subr.mxu0 0.0
    %726 = vmatpush1.msra.mxu0 0.0
    %727 = vmatprep.subr.mxu0 0.0
    %728 = vmatpush1.msra.mxu0 0.0
    %729 = vmatprep.subr.mxu0 0.0
    %730 = vmatpush1.msra.mxu0 0.0
    %731 = vmatprep.subr.mxu0 0.0
    %732 = vmatpush1.msra.mxu0 0.0
    %733 = vmatprep.subr.mxu0 0.0
    %734 = vmatpush1.msra.mxu0 0.0
    %735 = vmatprep.mubr.f32.mxu0 0.0
    %736 = vmatmul.mubr.f32.gmra.mrb[0].mxu0 %v669
    %v737 = vpop.f32.mrb[0].mxu0
    %v738 = vadd.f32 0.0, %v737
    %v739 = vpop.f32.mrb[0].mxu0
    %740 = vdwg.mxu0
    %v741 = vadd.f32 %v668, %v738
    %v742 = vxor.u32 %v741, 2147483648
    %v743 = vmul.f32 %v742, 1.442695
    %v744 = vpow.pop %v743
    %v745 = vadd.f32 %v744, 1.0
    %v746 = vrcp.pop %v745
    %v747 = vmul.f32 1.0, %v746
    %v748 = vtanh.pop %v741
    %v749 = vmul.f32 %v747, %v656
    %751 = vrot.lane.b32.xlu0 %v748, 64
    %v752 = vpop.permute.xlu0 %751
    %v754 = vmul.f32 %v747, %v752
    %756 = vrot.lane.b32.xlu0 %v754, 32
    %v757 = vpop.permute.xlu0 %756
    %v759 = vadd.f32 %v749, %v757
    %v760 = vtanh.pop %v759
    %762 = vrot.lane.b32.xlu0 %v760, 64
    %v763 = vpop.permute.xlu0 %762
    %v765 = vmul.f32 %v747, %v763
    %767 = vrot.lane.b32.xlu0 %v765, 32
    %v768 = vpop.permute.xlu0 %767
    %770 = vst.msk [vmem:[#allocation3 + $0x5] sm:$0x1] %vm254, %v768
    %v771 = vld [vmem:[#allocation2 + $0x6] sm:$0x1]
    %v772 = vsel %vm120, %v768, 0
    %774 = vmatprep.subr.mxu0 0.0
    %775 = vmatpush1.msra.mxu0 %v137
    %776 = vmatprep.subr.mxu0 0.0
    %777 = vmatpush1.msra.mxu0 %v138
    %778 = vmatprep.subr.mxu0 0.0
    %779 = vmatpush1.msra.mxu0 %v139
    %780 = vmatprep.subr.mxu0 0.0
    %781 = vmatpush1.msra.mxu0 %v140
    %782 = vmatprep.subr.mxu0 0.0
    %783 = vmatpush1.msra.mxu0 0.0
    %784 = vmatprep.subr.mxu0 0.0
    %785 = vmatpush1.msra.mxu0 0.0
    %786 = vmatprep.subr.mxu0 0.0
    %787 = vmatpush1.msra.mxu0 0.0
    %788 = vmatprep.subr.mxu0 0.0
    %789 = vmatpush1.msra.mxu0 0.0
    %790 = vmatprep.subr.mxu0 0.0
    %791 = vmatpush1.msra.mxu0 0.0
    %792 = vmatprep.subr.mxu0 0.0
    %793 = vmatpush1.msra.mxu0 0.0
    %794 = vmatprep.subr.mxu0 0.0
    %795 = vmatpush1.msra.mxu0 0.0
    %796 = vmatprep.subr.mxu0 0.0
    %797 = vmatpush1.msra.mxu0 0.0
    %798 = vmatprep.subr.mxu0 0.0
    %799 = vmatpush1.msra.mxu0 0.0
    %800 = vmatprep.subr.mxu0 0.0
    %801 = vmatpush1.msra.mxu0 0.0
    %802 = vmatprep.subr.mxu0 0.0
    %803 = vmatpush1.msra.mxu0 0.0
    %804 = vmatprep.subr.mxu0 0.0
    %805 = vmatpush1.msra.mxu0 0.0
    %806 = vmatprep.subr.mxu0 0.0
    %807 = vmatpush1.msra.mxu0 0.0
    %808 = vmatprep.subr.mxu0 0.0
    %809 = vmatpush1.msra.mxu0 0.0
    %810 = vmatprep.subr.mxu0 0.0
    %811 = vmatpush1.msra.mxu0 0.0
    %812 = vmatprep.subr.mxu0 0.0
    %813 = vmatpush1.msra.mxu0 0.0
    %814 = vmatprep.subr.mxu0 0.0
    %815 = vmatpush1.msra.mxu0 0.0
    %816 = vmatprep.subr.mxu0 0.0
    %817 = vmatpush1.msra.mxu0 0.0
    %818 = vmatprep.subr.mxu0 0.0
    %819 = vmatpush1.msra.mxu0 0.0
    %820 = vmatprep.subr.mxu0 0.0
    %821 = vmatpush1.msra.mxu0 0.0
    %822 = vmatprep.subr.mxu0 0.0
    %823 = vmatpush1.msra.mxu0 0.0
    %824 = vmatprep.subr.mxu0 0.0
    %825 = vmatpush1.msra.mxu0 0.0
    %826 = vmatprep.subr.mxu0 0.0
    %827 = vmatpush1.msra.mxu0 0.0
    %828 = vmatprep.subr.mxu0 0.0
    %829 = vmatpush1.msra.mxu0 0.0
    %830 = vmatprep.subr.mxu0 0.0
    %831 = vmatpush1.msra.mxu0 0.0
    %832 = vmatprep.subr.mxu0 0.0
    %833 = vmatpush1.msra.mxu0 0.0
    %834 = vmatprep.subr.mxu0 0.0
    %835 = vmatpush1.msra.mxu0 0.0
    %836 = vmatprep.subr.mxu0 0.0
    %837 = vmatpush1.msra.mxu0 0.0
    %838 = vmatprep.mubr.f32.mxu0 0.0
    %839 = vmatmul.mubr.f32.gmra.mrb[0].mxu0 %v772
    %v840 = vpop.f32.mrb[0].mxu0
    %v841 = vadd.f32 0.0, %v840
    %v842 = vpop.f32.mrb[0].mxu0
    %843 = vdwg.mxu0
    %v844 = vadd.f32 %v771, %v841
    %v845 = vxor.u32 %v844, 2147483648
    %v846 = vmul.f32 %v845, 1.442695
    %v847 = vpow.pop %v846
    %v848 = vadd.f32 %v847, 1.0
    %v849 = vrcp.pop %v848
    %v850 = vmul.f32 1.0, %v849
    %v851 = vtanh.pop %v844
    %v852 = vmul.f32 %v850, %v759
    %854 = vrot.lane.b32.xlu0 %v851, 64
    %v855 = vpop.permute.xlu0 %854
    %v857 = vmul.f32 %v850, %v855
    %859 = vrot.lane.b32.xlu0 %v857, 32
    %v860 = vpop.permute.xlu0 %859
    %v862 = vadd.f32 %v852, %v860
    %v863 = vtanh.pop %v862
    %865 = vrot.lane.b32.xlu0 %v863, 64
    %v866 = vpop.permute.xlu0 %865
    %v868 = vmul.f32 %v850, %v866
    %870 = vrot.lane.b32.xlu0 %v868, 32
    %v871 = vpop.permute.xlu0 %870
    %873 = vst.msk [vmem:[#allocation3 + $0x6] sm:$0x1] %vm254, %v871
    %v874 = vld [vmem:[#allocation2 + $0x7] sm:$0x1]
    %v875 = vsel %vm120, %v871, 0
    %877 = vmatprep.subr.mxu0 0.0
    %878 = vmatpush1.msra.mxu0 %v137
    %879 = vmatprep.subr.mxu0 0.0
    %880 = vmatpush1.msra.mxu0 %v138
    %881 = vmatprep.subr.mxu0 0.0
    %882 = vmatpush1.msra.mxu0 %v139
    %883 = vmatprep.subr.mxu0 0.0
    %884 = vmatpush1.msra.mxu0 %v140
    %885 = vmatprep.subr.mxu0 0.0
    %886 = vmatpush1.msra.mxu0 0.0
    %887 = vmatprep.subr.mxu0 0.0
    %888 = vmatpush1.msra.mxu0 0.0
    %889 = vmatprep.subr.mxu0 0.0
    %890 = vmatpush1.msra.mxu0 0.0
    %891 = vmatprep.subr.mxu0 0.0
    %892 = vmatpush1.msra.mxu0 0.0
    %893 = vmatprep.subr.mxu0 0.0
    %894 = vmatpush1.msra.mxu0 0.0
    %895 = vmatprep.subr.mxu0 0.0
    %896 = vmatpush1.msra.mxu0 0.0
    %897 = vmatprep.subr.mxu0 0.0
    %898 = vmatpush1.msra.mxu0 0.0
    %899 = vmatprep.subr.mxu0 0.0
    %900 = vmatpush1.msra.mxu0 0.0
    %901 = vmatprep.subr.mxu0 0.0
    %902 = vmatpush1.msra.mxu0 0.0
    %903 = vmatprep.subr.mxu0 0.0
    %904 = vmatpush1.msra.mxu0 0.0
    %905 = vmatprep.subr.mxu0 0.0
    %906 = vmatpush1.msra.mxu0 0.0
    %907 = vmatprep.subr.mxu0 0.0
    %908 = vmatpush1.msra.mxu0 0.0
    %909 = vmatprep.subr.mxu0 0.0
    %910 = vmatpush1.msra.mxu0 0.0
    %911 = vmatprep.subr.mxu0 0.0
    %912 = vmatpush1.msra.mxu0 0.0
    %913 = vmatprep.subr.mxu0 0.0
    %914 = vmatpush1.msra.mxu0 0.0
    %915 = vmatprep.subr.mxu0 0.0
    %916 = vmatpush1.msra.mxu0 0.0
    %917 = vmatprep.subr.mxu0 0.0
    %918 = vmatpush1.msra.mxu0 0.0
    %919 = vmatprep.subr.mxu0 0.0
    %920 = vmatpush1.msra.mxu0 0.0
    %921 = vmatprep.subr.mxu0 0.0
    %922 = vmatpush1.msra.mxu0 0.0
    %923 = vmatprep.subr.mxu0 0.0
    %924 = vmatpush1.msra.mxu0 0.0
    %925 = vmatprep.subr.mxu0 0.0
    %926 = vmatpush1.msra.mxu0 0.0
    %927 = vmatprep.subr.mxu0 0.0
    %928 = vmatpush1.msra.mxu0 0.0
    %929 = vmatprep.subr.mxu0 0.0
    %930 = vmatpush1.msra.mxu0 0.0
    %931 = vmatprep.subr.mxu0 0.0
    %932 = vmatpush1.msra.mxu0 0.0
    %933 = vmatprep.subr.mxu0 0.0
    %934 = vmatpush1.msra.mxu0 0.0
    %935 = vmatprep.subr.mxu0 0.0
    %936 = vmatpush1.msra.mxu0 0.0
    %937 = vmatprep.subr.mxu0 0.0
    %938 = vmatpush1.msra.mxu0 0.0
    %939 = vmatprep.subr.mxu0 0.0
    %940 = vmatpush1.msra.mxu0 0.0
    %941 = vmatprep.mubr.f32.mxu0 0.0
    %942 = vmatmul.mubr.f32.gmra.mrb[0].mxu0 %v875
    %v943 = vpop.f32.mrb[0].mxu0
    %v944 = vadd.f32 0.0, %v943
    %v945 = vpop.f32.mrb[0].mxu0
    %946 = vdwg.mxu0
    %v947 = vadd.f32 %v874, %v944
    %v948 = vxor.u32 %v947, 2147483648
    %v949 = vmul.f32 %v948, 1.442695
    %v950 = vpow.pop %v949
    %v951 = vadd.f32 %v950, 1.0
    %v952 = vrcp.pop %v951
    %v953 = vmul.f32 1.0, %v952
    %v954 = vtanh.pop %v947
    %v955 = vmul.f32 %v953, %v862
    %957 = vrot.lane.b32.xlu0 %v954, 64
    %v958 = vpop.permute.xlu0 %957
    %v960 = vmul.f32 %v953, %v958
    %962 = vrot.lane.b32.xlu0 %v960, 32
    %v963 = vpop.permute.xlu0 %962
    %v965 = vadd.f32 %v955, %v963
    %v966 = vtanh.pop %v965
    %968 = vrot.lane.b32.xlu0 %v966, 64
    %v969 = vpop.permute.xlu0 %968
    %v971 = vmul.f32 %v953, %v969
    %973 = vrot.lane.b32.xlu0 %v971, 32
    %v974 = vpop.permute.xlu0 %973
    %976 = vst.msk [vmem:[#allocation3 + $0x7] sm:$0x1] %vm254, %v974
    %v977 = vld [vmem:[#allocation3] sm:$0xff]
    %v978 = vld [vmem:[#allocation3 + $0x8] sm:$0xff]
    %v979 = vld [vmem:[#allocation3 + $0x10] sm:$0xff]
    %v980 = vld [vmem:[#allocation3 + $0x18] sm:$0xff]
    %v981 = vld [vmem:[#allocation3 + $0x20] sm:$0xff]
    %v982 = vld [vmem:[#allocation3 + $0x28] sm:$0xff]
    %v983 = vld [vmem:[#allocation3 + $0x30] sm:$0xff]
    %v984 = vld [vmem:[#allocation3 + $0x38] sm:$0xff]
    %v985 = vld [vmem:[#allocation3 + $0x40] sm:$0xff]
    %v986 = vld [vmem:[#allocation3 + $0x48] sm:$0xff]
    %v987 = vld [vmem:[#allocation3 + $0x50] sm:$0xff]
    %v988 = vld [vmem:[#allocation3 + $0x58] sm:$0xff]
    %v989 = vld [vmem:[#allocation3 + $0x60] sm:$0xff]
    %v990 = vld [vmem:[#allocation3 + $0x68] sm:$0xff]
    %v991 = vld [vmem:[#allocation3 + $0x70] sm:$0xff]
    %v992 = vld [vmem:[#allocation3 + $0x78] sm:$0xff]
    %v993 = vld [vmem:[%s6] sm:$0xff]
    %v994 = vld [vmem:[%s6 + $0x8] sm:$0xff]
    %v995 = vld [vmem:[%s6 + $0x10] sm:$0xff]
    %v996 = vld [vmem:[%s6 + $0x18] sm:$0xff]
    %v997 = vld [vmem:[#allocation4] sm:$0x1]
    %v999 = vlaneseq
    %v1000 = vshrl.u32 %v999, 7
    %v1001 = vsub.s32 0, %v1000
    %v1002 = vrot.slane %v997, %v1001
    %v1005 = vsel %vm120, %v977, 0
    %v1008 = vsel %vm120, %v978, 0
    %v1011 = vsel %vm120, %v979, 0
    %v1014 = vsel %vm120, %v980, 0
    %v1017 = vsel %vm120, %v981, 0
    %v1020 = vsel %vm120, %v982, 0
    %v1023 = vsel %vm120, %v983, 0
    %v1026 = vsel %vm120, %v984, 0
    %v1029 = vsel %vm120, %v985, 0
    %v1032 = vsel %vm120, %v986, 0
    %v1035 = vsel %vm120, %v987, 0
    %v1038 = vsel %vm120, %v988, 0
    %v1041 = vsel %vm120, %v989, 0
    %v1044 = vsel %vm120, %v990, 0
    %v1047 = vsel %vm120, %v991, 0
    %v1050 = vsel %vm120, %v992, 0
    %1052 = vmatprep.subr.mxu0 0.0
    %1053 = vmatpush1.msra.mxu0 %v993
    %1054 = vmatprep.subr.mxu0 0.0
    %1055 = vmatpush1.msra.mxu0 %v994
    %1056 = vmatprep.subr.mxu0 0.0
    %1057 = vmatpush1.msra.mxu0 %v995
    %1058 = vmatprep.subr.mxu0 0.0
    %1059 = vmatpush1.msra.mxu0 %v996
    %1060 = vmatprep.subr.mxu0 0.0
    %1061 = vmatpush1.msra.mxu0 0.0
    %1062 = vmatprep.subr.mxu0 0.0
    %1063 = vmatpush1.msra.mxu0 0.0
    %1064 = vmatprep.subr.mxu0 0.0
    %1065 = vmatpush1.msra.mxu0 0.0
    %1066 = vmatprep.subr.mxu0 0.0
    %1067 = vmatpush1.msra.mxu0 0.0
    %1068 = vmatprep.subr.mxu0 0.0
    %1069 = vmatpush1.msra.mxu0 0.0
    %1070 = vmatprep.subr.mxu0 0.0
    %1071 = vmatpush1.msra.mxu0 0.0
    %1072 = vmatprep.subr.mxu0 0.0
    %1073 = vmatpush1.msra.mxu0 0.0
    %1074 = vmatprep.subr.mxu0 0.0
    %1075 = vmatpush1.msra.mxu0 0.0
    %1076 = vmatprep.subr.mxu0 0.0
    %1077 = vmatpush1.msra.mxu0 0.0
    %1078 = vmatprep.subr.mxu0 0.0
    %1079 = vmatpush1.msra.mxu0 0.0
    %1080 = vmatprep.subr.mxu0 0.0
    %1081 = vmatpush1.msra.mxu0 0.0
    %1082 = vmatprep.subr.mxu0 0.0
    %1083 = vmatpush1.msra.mxu0 0.0
    %1084 = vmatprep.subr.mxu0 0.0
    %1085 = vmatpush1.msra.mxu0 0.0
    %1086 = vmatprep.subr.mxu0 0.0
    %1087 = vmatpush1.msra.mxu0 0.0
    %1088 = vmatprep.subr.mxu0 0.0
    %1089 = vmatpush1.msra.mxu0 0.0
    %1090 = vmatprep.subr.mxu0 0.0
    %1091 = vmatpush1.msra.mxu0 0.0
    %1092 = vmatprep.subr.mxu0 0.0
    %1093 = vmatpush1.msra.mxu0 0.0
    %1094 = vmatprep.subr.mxu0 0.0
    %1095 = vmatpush1.msra.mxu0 0.0
    %1096 = vmatprep.subr.mxu0 0.0
    %1097 = vmatpush1.msra.mxu0 0.0
    %1098 = vmatprep.subr.mxu0 0.0
    %1099 = vmatpush1.msra.mxu0 0.0
    %1100 = vmatprep.subr.mxu0 0.0
    %1101 = vmatpush1.msra.mxu0 0.0
    %1102 = vmatprep.subr.mxu0 0.0
    %1103 = vmatpush1.msra.mxu0 0.0
    %1104 = vmatprep.subr.mxu0 0.0
    %1105 = vmatpush1.msra.mxu0 0.0
    %1106 = vmatprep.subr.mxu0 0.0
    %1107 = vmatpush1.msra.mxu0 0.0
    %1108 = vmatprep.subr.mxu0 0.0
    %1109 = vmatpush1.msra.mxu0 0.0
    %1110 = vmatprep.subr.mxu0 0.0
    %1111 = vmatpush1.msra.mxu0 0.0
    %1112 = vmatprep.subr.mxu0 0.0
    %1113 = vmatpush1.msra.mxu0 0.0
    %1114 = vmatprep.subr.mxu0 0.0
    %1115 = vmatpush1.msra.mxu0 0.0
    %1116 = vmatprep.mubr.f32.mxu0 0.0
    %1117 = vmatmul.mubr.f32.gmra.mrb[0].mxu0 %v1005
    %v1118 = vpop.f32.mrb[0].mxu0
    %v1119 = vadd.f32 %v1002, %v1118
    %v1120 = vpop.f32.mrb[0].mxu0
    %1121 = vmatprep.mubr.f32.mxu0 0.0
    %1122 = vmatmul.mubr.f32.gmra.mrb[0].mxu0 %v1008
    %v1123 = vpop.f32.mrb[0].mxu0
    %v1124 = vadd.f32 %v1002, %v1123
    %v1125 = vpop.f32.mrb[0].mxu0
    %1126 = vmatprep.mubr.f32.mxu0 0.0
    %1127 = vmatmul.mubr.f32.gmra.mrb[0].mxu0 %v1011
    %v1128 = vpop.f32.mrb[0].mxu0
    %v1129 = vadd.f32 %v1002, %v1128
    %v1130 = vpop.f32.mrb[0].mxu0
    %1131 = vmatprep.mubr.f32.mxu0 0.0
    %1132 = vmatmul.mubr.f32.gmra.mrb[0].mxu0 %v1014
    %v1133 = vpop.f32.mrb[0].mxu0
    %v1134 = vadd.f32 %v1002, %v1133
    %v1135 = vpop.f32.mrb[0].mxu0
    %1136 = vmatprep.mubr.f32.mxu0 0.0
    %1137 = vmatmul.mubr.f32.gmra.mrb[0].mxu0 %v1017
    %v1138 = vpop.f32.mrb[0].mxu0
    %v1139 = vadd.f32 %v1002, %v1138
    %v1140 = vpop.f32.mrb[0].mxu0
    %1141 = vmatprep.mubr.f32.mxu0 0.0
    %1142 = vmatmul.mubr.f32.gmra.mrb[0].mxu0 %v1020
    %v1143 = vpop.f32.mrb[0].mxu0
    %v1144 = vadd.f32 %v1002, %v1143
    %v1145 = vpop.f32.mrb[0].mxu0
    %1146 = vmatprep.mubr.f32.mxu0 0.0
    %1147 = vmatmul.mubr.f32.gmra.mrb[0].mxu0 %v1023
    %v1148 = vpop.f32.mrb[0].mxu0
    %v1149 = vadd.f32 %v1002, %v1148
    %v1150 = vpop.f32.mrb[0].mxu0
    %1151 = vmatprep.mubr.f32.mxu0 0.0
    %1152 = vmatmul.mubr.f32.gmra.mrb[0].mxu0 %v1026
    %v1153 = vpop.f32.mrb[0].mxu0
    %v1154 = vadd.f32 %v1002, %v1153
    %v1155 = vpop.f32.mrb[0].mxu0
    %1156 = vmatprep.mubr.f32.mxu0 0.0
    %1157 = vmatmul.mubr.f32.gmra.mrb[0].mxu0 %v1029
    %v1158 = vpop.f32.mrb[0].mxu0
    %v1159 = vadd.f32 %v1002, %v1158
    %v1160 = vpop.f32.mrb[0].mxu0
    %1161 = vmatprep.mubr.f32.mxu0 0.0
    %1162 = vmatmul.mubr.f32.gmra.mrb[0].mxu0 %v1032
    %v1163 = vpop.f32.mrb[0].mxu0
    %v1164 = vadd.f32 %v1002, %v1163
    %v1165 = vpop.f32.mrb[0].mxu0
    %1166 = vmatprep.mubr.f32.mxu0 0.0
    %1167 = vmatmul.mubr.f32.gmra.mrb[0].mxu0 %v1035
    %v1168 = vpop.f32.mrb[0].mxu0
    %v1169 = vadd.f32 %v1002, %v1168
    %v1170 = vpop.f32.mrb[0].mxu0
    %1171 = vmatprep.mubr.f32.mxu0 0.0
    %1172 = vmatmul.mubr.f32.gmra.mrb[0].mxu0 %v1038
    %v1173 = vpop.f32.mrb[0].mxu0
    %v1174 = vadd.f32 %v1002, %v1173
    %v1175 = vpop.f32.mrb[0].mxu0
    %1176 = vmatprep.mubr.f32.mxu0 0.0
    %1177 = vmatmul.mubr.f32.gmra.mrb[0].mxu0 %v1041
    %v1178 = vpop.f32.mrb[0].mxu0
    %v1179 = vadd.f32 %v1002, %v1178
    %v1180 = vpop.f32.mrb[0].mxu0
    %1181 = vmatprep.mubr.f32.mxu0 0.0
    %1182 = vmatmul.mubr.f32.gmra.mrb[0].mxu0 %v1044
    %v1183 = vpop.f32.mrb[0].mxu0
    %v1184 = vadd.f32 %v1002, %v1183
    %v1185 = vpop.f32.mrb[0].mxu0
    %1186 = vmatprep.mubr.f32.mxu0 0.0
    %1187 = vmatmul.mubr.f32.gmra.mrb[0].mxu0 %v1047
    %v1188 = vpop.f32.mrb[0].mxu0
    %v1189 = vadd.f32 %v1002, %v1188
    %v1190 = vpop.f32.mrb[0].mxu0
    %1191 = vmatprep.mubr.f32.mxu0 0.0
    %1192 = vmatmul.mubr.f32.gmra.mrb[0].mxu0 %v1050
    %v1193 = vpop.f32.mrb[0].mxu0
    %v1194 = vadd.f32 %v1002, %v1193
    %v1195 = vpop.f32.mrb[0].mxu0
    %1196 = vdwg.mxu0
    %v1197 = vmax.f32 %v1119, 0.0
    %v1198 = vmax.f32 %v1124, 0.0
    %v1199 = vmax.f32 %v1129, 0.0
    %v1200 = vmax.f32 %v1134, 0.0
    %v1201 = vmax.f32 %v1139, 0.0
    %v1202 = vmax.f32 %v1144, 0.0
    %v1203 = vmax.f32 %v1149, 0.0
    %v1204 = vmax.f32 %v1154, 0.0
    %v1205 = vmax.f32 %v1159, 0.0
    %v1206 = vmax.f32 %v1164, 0.0
    %v1207 = vmax.f32 %v1169, 0.0
    %v1208 = vmax.f32 %v1174, 0.0
    %v1209 = vmax.f32 %v1179, 0.0
    %v1210 = vmax.f32 %v1184, 0.0
    %v1211 = vmax.f32 %v1189, 0.0
    %v1212 = vmax.f32 %v1194, 0.0
    %vm1213 = vcmp.ne.f32.partialorder %v1119, %v1119
    %vm1214 = vcmp.ne.f32.partialorder %v1124, %v1124
    %vm1215 = vcmp.ne.f32.partialorder %v1129, %v1129
    %vm1216 = vcmp.ne.f32.partialorder %v1134, %v1134
    %vm1217 = vcmp.ne.f32.partialorder %v1139, %v1139
    %vm1218 = vcmp.ne.f32.partialorder %v1144, %v1144
    %vm1219 = vcmp.ne.f32.partialorder %v1149, %v1149
    %vm1220 = vcmp.ne.f32.partialorder %v1154, %v1154
    %vm1221 = vcmp.ne.f32.partialorder %v1159, %v1159
    %vm1222 = vcmp.ne.f32.partialorder %v1164, %v1164
    %vm1223 = vcmp.ne.f32.partialorder %v1169, %v1169
    %vm1224 = vcmp.ne.f32.partialorder %v1174, %v1174
    %vm1225 = vcmp.ne.f32.partialorder %v1179, %v1179
    %vm1226 = vcmp.ne.f32.partialorder %v1184, %v1184
    %vm1227 = vcmp.ne.f32.partialorder %v1189, %v1189
    %vm1228 = vcmp.ne.f32.partialorder %v1194, %v1194
    %v1229 = vadd.f32 %v1119, 0.0
    %v1230 = vadd.f32 %v1124, 0.0
    %v1231 = vadd.f32 %v1129, 0.0
    %v1232 = vadd.f32 %v1134, 0.0
    %v1233 = vadd.f32 %v1139, 0.0
    %v1234 = vadd.f32 %v1144, 0.0
    %v1235 = vadd.f32 %v1149, 0.0
    %v1236 = vadd.f32 %v1154, 0.0
    %v1237 = vadd.f32 %v1159, 0.0
    %v1238 = vadd.f32 %v1164, 0.0
    %v1239 = vadd.f32 %v1169, 0.0
    %v1240 = vadd.f32 %v1174, 0.0
    %v1241 = vadd.f32 %v1179, 0.0
    %v1242 = vadd.f32 %v1184, 0.0
    %v1243 = vadd.f32 %v1189, 0.0
    %v1244 = vadd.f32 %v1194, 0.0
    %v1245 = vand.u32 2147483647, %v1119
    %v1246 = vand.u32 2147483647, %v1124
    %v1247 = vand.u32 2147483647, %v1129
    %v1248 = vand.u32 2147483647, %v1134
    %v1249 = vand.u32 2147483647, %v1139
    %v1250 = vand.u32 2147483647, %v1144
    %v1251 = vand.u32 2147483647, %v1149
    %v1252 = vand.u32 2147483647, %v1154
    %v1253 = vand.u32 2147483647, %v1159
    %v1254 = vand.u32 2147483647, %v1164
    %v1255 = vand.u32 2147483647, %v1169
    %v1256 = vand.u32 2147483647, %v1174
    %v1257 = vand.u32 2147483647, %v1179
    %v1258 = vand.u32 2147483647, %v1184
    %v1259 = vand.u32 2147483647, %v1189
    %v1260 = vand.u32 2147483647, %v1194
    %v1261 = vsub.f32 0.0, %v1245
    %v1262 = vsub.f32 0.0, %v1246
    %v1263 = vsub.f32 0.0, %v1247
    %v1264 = vsub.f32 0.0, %v1248
    %v1265 = vsub.f32 0.0, %v1249
    %v1266 = vsub.f32 0.0, %v1250
    %v1267 = vsub.f32 0.0, %v1251
    %v1268 = vsub.f32 0.0, %v1252
    %v1269 = vsub.f32 0.0, %v1253
    %v1270 = vsub.f32 0.0, %v1254
    %v1271 = vsub.f32 0.0, %v1255
    %v1272 = vsub.f32 0.0, %v1256
    %v1273 = vsub.f32 0.0, %v1257
    %v1274 = vsub.f32 0.0, %v1258
    %v1275 = vsub.f32 0.0, %v1259
    %v1276 = vsub.f32 0.0, %v1260
    %v1277 = vmul.f32 %v1261, 1.442695
    %v1278 = vpow.pop %v1277
    %v1279 = vmul.f32 %v1262, 1.442695
    %v1280 = vpow.pop %v1279
    %v1281 = vmul.f32 %v1263, 1.442695
    %v1282 = vpow.pop %v1281
    %v1283 = vmul.f32 %v1264, 1.442695
    %v1284 = vpow.pop %v1283
    %v1285 = vmul.f32 %v1265, 1.442695
    %v1286 = vpow.pop %v1285
    %v1287 = vmul.f32 %v1266, 1.442695
    %v1288 = vpow.pop %v1287
    %v1289 = vmul.f32 %v1267, 1.442695
    %v1290 = vpow.pop %v1289
    %v1291 = vmul.f32 %v1268, 1.442695
    %v1292 = vpow.pop %v1291
    %v1293 = vmul.f32 %v1269, 1.442695
    %v1294 = vpow.pop %v1293
    %v1295 = vmul.f32 %v1270, 1.442695
    %v1296 = vpow.pop %v1295
    %v1297 = vmul.f32 %v1271, 1.442695
    %v1298 = vpow.pop %v1297
    %v1299 = vmul.f32 %v1272, 1.442695
    %v1300 = vpow.pop %v1299
    %v1301 = vmul.f32 %v1273, 1.442695
    %v1302 = vpow.pop %v1301
    %v1303 = vmul.f32 %v1274, 1.442695
    %v1304 = vpow.pop %v1303
    %v1305 = vmul.f32 %v1275, 1.442695
    %v1306 = vpow.pop %v1305
    %v1307 = vmul.f32 %v1276, 1.442695
    %v1308 = vpow.pop %v1307
    %v1309 = vadd.f32 %v1278, 1.0
    %v1310 = vlog2.pop %v1309
    %v1311 = vmul.f32 %v1310, 0.6931472
    %v1312 = vmul.f32 -0.5, %v1278
    %v1313 = vadd.f32 %v1312, 1.0
    %v1314 = vmul.f32 %v1313, %v1278
    %v1315 = vand.u32 2147483647, %v1278
    %vm1316 = vcmp.lt.f32.partialorder %v1315, 0.0004427343
    %v1317 = vsel %vm1316, %v1314, %v1311
    %v1318 = vadd.f32 %v1280, 1.0
    %v1319 = vlog2.pop %v1318
    %v1320 = vmul.f32 %v1319, 0.6931472
    %v1321 = vmul.f32 -0.5, %v1280
    %v1322 = vadd.f32 %v1321, 1.0
    %v1323 = vmul.f32 %v1322, %v1280
    %v1324 = vand.u32 2147483647, %v1280
    %vm1325 = vcmp.lt.f32.partialorder %v1324, 0.0004427343
    %v1326 = vsel %vm1325, %v1323, %v1320
    %v1327 = vadd.f32 %v1282, 1.0
    %v1328 = vlog2.pop %v1327
    %v1329 = vmul.f32 %v1328, 0.6931472
    %v1330 = vmul.f32 -0.5, %v1282
    %v1331 = vadd.f32 %v1330, 1.0
    %v1332 = vmul.f32 %v1331, %v1282
    %v1333 = vand.u32 2147483647, %v1282
    %vm1334 = vcmp.lt.f32.partialorder %v1333, 0.0004427343
    %v1335 = vsel %vm1334, %v1332, %v1329
    %v1336 = vadd.f32 %v1284, 1.0
    %v1337 = vlog2.pop %v1336
    %v1338 = vmul.f32 %v1337, 0.6931472
    %v1339 = vmul.f32 -0.5, %v1284
    %v1340 = vadd.f32 %v1339, 1.0
    %v1341 = vmul.f32 %v1340, %v1284
    %v1342 = vand.u32 2147483647, %v1284
    %vm1343 = vcmp.lt.f32.partialorder %v1342, 0.0004427343
    %v1344 = vsel %vm1343, %v1341, %v1338
    %v1345 = vadd.f32 %v1286, 1.0
    %v1346 = vlog2.pop %v1345
    %v1347 = vmul.f32 %v1346, 0.6931472
    %v1348 = vmul.f32 -0.5, %v1286
    %v1349 = vadd.f32 %v1348, 1.0
    %v1350 = vmul.f32 %v1349, %v1286
    %v1351 = vand.u32 2147483647, %v1286
    %vm1352 = vcmp.lt.f32.partialorder %v1351, 0.0004427343
    %v1353 = vsel %vm1352, %v1350, %v1347
    %v1354 = vadd.f32 %v1288, 1.0
    %v1355 = vlog2.pop %v1354
    %v1356 = vmul.f32 %v1355, 0.6931472
    %v1357 = vmul.f32 -0.5, %v1288
    %v1358 = vadd.f32 %v1357, 1.0
    %v1359 = vmul.f32 %v1358, %v1288
    %v1360 = vand.u32 2147483647, %v1288
    %vm1361 = vcmp.lt.f32.partialorder %v1360, 0.0004427343
    %v1362 = vsel %vm1361, %v1359, %v1356
    %v1363 = vadd.f32 %v1290, 1.0
    %v1364 = vlog2.pop %v1363
    %v1365 = vmul.f32 %v1364, 0.6931472
    %v1366 = vmul.f32 -0.5, %v1290
    %v1367 = vadd.f32 %v1366, 1.0
    %v1368 = vmul.f32 %v1367, %v1290
    %v1369 = vand.u32 2147483647, %v1290
    %vm1370 = vcmp.lt.f32.partialorder %v1369, 0.0004427343
    %v1371 = vsel %vm1370, %v1368, %v1365
    %v1372 = vadd.f32 %v1292, 1.0
    %v1373 = vlog2.pop %v1372
    %v1374 = vmul.f32 %v1373, 0.6931472
    %v1375 = vmul.f32 -0.5, %v1292
    %v1376 = vadd.f32 %v1375, 1.0
    %v1377 = vmul.f32 %v1376, %v1292
    %v1378 = vand.u32 2147483647, %v1292
    %vm1379 = vcmp.lt.f32.partialorder %v1378, 0.0004427343
    %v1380 = vsel %vm1379, %v1377, %v1374
    %v1381 = vadd.f32 %v1294, 1.0
    %v1382 = vlog2.pop %v1381
    %v1383 = vmul.f32 %v1382, 0.6931472
    %v1384 = vmul.f32 -0.5, %v1294
    %v1385 = vadd.f32 %v1384, 1.0
    %v1386 = vmul.f32 %v1385, %v1294
    %v1387 = vand.u32 2147483647, %v1294
    %vm1388 = vcmp.lt.f32.partialorder %v1387, 0.0004427343
    %v1389 = vsel %vm1388, %v1386, %v1383
    %v1390 = vadd.f32 %v1296, 1.0
    %v1391 = vlog2.pop %v1390
    %v1392 = vmul.f32 %v1391, 0.6931472
    %v1393 = vmul.f32 -0.5, %v1296
    %v1394 = vadd.f32 %v1393, 1.0
    %v1395 = vmul.f32 %v1394, %v1296
    %v1396 = vand.u32 2147483647, %v1296
    %vm1397 = vcmp.lt.f32.partialorder %v1396, 0.0004427343
    %v1398 = vsel %vm1397, %v1395, %v1392
    %v1399 = vadd.f32 %v1298, 1.0
    %v1400 = vlog2.pop %v1399
    %v1401 = vmul.f32 %v1400, 0.6931472
    %v1402 = vmul.f32 -0.5, %v1298
    %v1403 = vadd.f32 %v1402, 1.0
    %v1404 = vmul.f32 %v1403, %v1298
    %v1405 = vand.u32 2147483647, %v1298
    %vm1406 = vcmp.lt.f32.partialorder %v1405, 0.0004427343
    %v1407 = vsel %vm1406, %v1404, %v1401
    %v1408 = vadd.f32 %v1300, 1.0
    %v1409 = vlog2.pop %v1408
    %v1410 = vmul.f32 %v1409, 0.6931472
    %v1411 = vmul.f32 -0.5, %v1300
    %v1412 = vadd.f32 %v1411, 1.0
    %v1413 = vmul.f32 %v1412, %v1300
    %v1414 = vand.u32 2147483647, %v1300
    %vm1415 = vcmp.lt.f32.partialorder %v1414, 0.0004427343
    %v1416 = vsel %vm1415, %v1413, %v1410
    %v1417 = vadd.f32 %v1302, 1.0
    %v1418 = vlog2.pop %v1417
    %v1419 = vmul.f32 %v1418, 0.6931472
    %v1420 = vmul.f32 -0.5, %v1302
    %v1421 = vadd.f32 %v1420, 1.0
    %v1422 = vmul.f32 %v1421, %v1302
    %v1423 = vand.u32 2147483647, %v1302
    %vm1424 = vcmp.lt.f32.partialorder %v1423, 0.0004427343
    %v1425 = vsel %vm1424, %v1422, %v1419
    %v1426 = vadd.f32 %v1304, 1.0
    %v1427 = vlog2.pop %v1426
    %v1428 = vmul.f32 %v1427, 0.6931472
    %v1429 = vmul.f32 -0.5, %v1304
    %v1430 = vadd.f32 %v1429, 1.0
    %v1431 = vmul.f32 %v1430, %v1304
    %v1432 = vand.u32 2147483647, %v1304
    %vm1433 = vcmp.lt.f32.partialorder %v1432, 0.0004427343
    %v1434 = vsel %vm1433, %v1431, %v1428
    %v1435 = vadd.f32 %v1306, 1.0
    %v1436 = vlog2.pop %v1435
    %v1437 = vmul.f32 %v1436, 0.6931472
    %v1438 = vmul.f32 -0.5, %v1306
    %v1439 = vadd.f32 %v1438, 1.0
    %v1440 = vmul.f32 %v1439, %v1306
    %v1441 = vand.u32 2147483647, %v1306
    %vm1442 = vcmp.lt.f32.partialorder %v1441, 0.0004427343
    %v1443 = vsel %vm1442, %v1440, %v1437
    %v1444 = vadd.f32 %v1308, 1.0
    %v1445 = vlog2.pop %v1444
    %v1446 = vmul.f32 %v1445, 0.6931472
    %v1447 = vmul.f32 -0.5, %v1308
    %v1448 = vadd.f32 %v1447, 1.0
    %v1449 = vmul.f32 %v1448, %v1308
    %v1450 = vand.u32 2147483647, %v1308
    %vm1451 = vcmp.lt.f32.partialorder %v1450, 0.0004427343
    %v1452 = vsel %vm1451, %v1449, %v1446
    %v1453 = vadd.f32 %v1197, %v1317
    %v1454 = vadd.f32 %v1198, %v1326
    %v1455 = vadd.f32 %v1199, %v1335
    %v1456 = vadd.f32 %v1200, %v1344
    %v1457 = vadd.f32 %v1201, %v1353
    %v1458 = vadd.f32 %v1202, %v1362
    %v1459 = vadd.f32 %v1203, %v1371
    %v1460 = vadd.f32 %v1204, %v1380
    %v1461 = vadd.f32 %v1205, %v1389
    %v1462 = vadd.f32 %v1206, %v1398
    %v1463 = vadd.f32 %v1207, %v1407
    %v1464 = vadd.f32 %v1208, %v1416
    %v1465 = vadd.f32 %v1209, %v1425
    %v1466 = vadd.f32 %v1210, %v1434
    %v1467 = vadd.f32 %v1211, %v1443
    %v1468 = vadd.f32 %v1212, %v1452
    %v1469 = vsel %vm1213, %v1229, %v1453
    %v1470 = vsel %vm1214, %v1230, %v1454
    %v1471 = vsel %vm1215, %v1231, %v1455
    %v1472 = vsel %vm1216, %v1232, %v1456
    %v1473 = vsel %vm1217, %v1233, %v1457
    %v1474 = vsel %vm1218, %v1234, %v1458
    %v1475 = vsel %vm1219, %v1235, %v1459
    %v1476 = vsel %vm1220, %v1236, %v1460
    %v1477 = vsel %vm1221, %v1237, %v1461
    %v1478 = vsel %vm1222, %v1238, %v1462
    %v1479 = vsel %vm1223, %v1239, %v1463
    %v1480 = vsel %vm1224, %v1240, %v1464
    %v1481 = vsel %vm1225, %v1241, %v1465
    %v1482 = vsel %vm1226, %v1242, %v1466
    %v1483 = vsel %vm1227, %v1243, %v1467
    %v1484 = vsel %vm1228, %v1244, %v1468
    %vm1485 = vcmask 7168
    %1486 = vst.msk [vmem:[%s8] sm:$0xff] %vm1485, %v1469
    %1487 = vst.msk [vmem:[%s8 + $0x8] sm:$0xff] %vm1485, %v1470
    %1488 = vst.msk [vmem:[%s8 + $0x10] sm:$0xff] %vm1485, %v1471
    %1489 = vst.msk [vmem:[%s8 + $0x18] sm:$0xff] %vm1485, %v1472
    %1490 = vst.msk [vmem:[%s8 + $0x20] sm:$0xff] %vm1485, %v1473
    %1491 = vst.msk [vmem:[%s8 + $0x28] sm:$0xff] %vm1485, %v1474
    %1492 = vst.msk [vmem:[%s8 + $0x30] sm:$0xff] %vm1485, %v1475
    %1493 = vst.msk [vmem:[%s8 + $0x38] sm:$0xff] %vm1485, %v1476
    %1494 = vst.msk [vmem:[%s8 + $0x40] sm:$0xff] %vm1485, %v1477
    %1495 = vst.msk [vmem:[%s8 + $0x48] sm:$0xff] %vm1485, %v1478
    %1496 = vst.msk [vmem:[%s8 + $0x50] sm:$0xff] %vm1485, %v1479
    %1497 = vst.msk [vmem:[%s8 + $0x58] sm:$0xff] %vm1485, %v1480
    %1498 = vst.msk [vmem:[%s8 + $0x60] sm:$0xff] %vm1485, %v1481
    %1499 = vst.msk [vmem:[%s8 + $0x68] sm:$0xff] %vm1485, %v1482
    %1500 = vst.msk [vmem:[%s8 + $0x70] sm:$0xff] %vm1485, %v1483
    %1501 = vst.msk [vmem:[%s8 + $0x78] sm:$0xff] %vm1485, %v1484
    %1502 = vst.msk [vmem:[#allocation5] sm:$0x1] %vm254, %v974
    %1504 = vrot.lane.b32.xlu0 %v965, 96
    %v1505 = vpop.permute.xlu0 %1504
    %1507 = vst.msk [vmem:[#allocation7] sm:$0x1] %vm254, %v1505
    // Predicated region
    $region34: #{lstm_decision_rollout.1} parent=1 // pred_check
      _
    $region35: #{lstm_decision_rollout.1} parent=1 // pred_check_branch
      %1509 = sbr.rel (0) target = $region37
    $region36: #{lstm_decision_rollout.1} parent=1 // pred_region
      _
    $region37: #{lstm_decision_rollout.1} parent=1 // pred_fallthru
      _
    // Predicated region
    $region38: #{lstm_decision_rollout.1} parent=1 // pred_check
      _
    $region39: #{lstm_decision_rollout.1} parent=1 // pred_check_branch
      %1511 = sbr.rel (0) target = $region41
    $region40: #{lstm_decision_rollout.1} parent=1 // pred_region
      %s1513 = ssub.s32 16, 16
      %1514 = vsyncadd [#allocation6], %s1513
      %s1516 = sshll.u32 [#allocation5], 4
      %s1517 = int_to_ptr.vmem [resolvable:$true] %s1516
      %1519 = dma.vmem_to_hbm [thread:$0]  %s1517, 16, %s9, [#allocation6]
    $region41: #{lstm_decision_rollout.1} parent=1 // pred_fallthru
      _
    // Predicated region
    $region42: #{lstm_decision_rollout.1} parent=1 // pred_check
      _
    $region43: #{lstm_decision_rollout.1} parent=1 // pred_check_branch
      %1521 = sbr.rel (0) target = $region45
    $region44: #{lstm_decision_rollout.1} parent=1 // pred_region
      %s1523 = ssub.s32 16, 16
      %1524 = vsyncadd [#allocation8], %s1523
      %s1526 = sshll.u32 [#allocation7], 4
      %s1527 = int_to_ptr.vmem [resolvable:$true] %s1526
      %1529 = dma.vmem_to_hbm [thread:$0]  %s1527, 16, %s10, [#allocation8]
    $region45: #{lstm_decision_rollout.1} parent=1 // pred_fallthru
      _
    // Predicated region
    $region46: #{lstm_decision_rollout.1} parent=1 // pred_check
      _
    $region47: #{lstm_decision_rollout.1} parent=1 // pred_check_branch
      %1531 = sbr.rel (0) target = $region49
    $region48: #{lstm_decision_rollout.1} parent=1 // pred_region
      _
    $region49: #{lstm_decision_rollout.1} parent=1 // pred_fallthru
      _
    // Predicated region
    $region50: #{lstm_decision_rollout.1} parent=1 // pred_check
      _
    $region51: #{lstm_decision_rollout.1} parent=1 // pred_check_branch
      %1533 = sbr.rel (0) target = $region53
    $region52: #{lstm_decision_rollout.1} parent=1 // pred_region
      %1534 = dma.done [#allocation6], 16
    $region53: #{lstm_decision_rollout.1} parent=1 // pred_fallthru
      _
    // Predicated region
    $region54: #{lstm_decision_rollout.1} parent=1 // pred_check
      _
    $region55: #{lstm_decision_rollout.1} parent=1 // pred_check_branch
      %1536 = sbr.rel (0) target = $region57
    $region56: #{lstm_decision_rollout.1} parent=1 // pred_region
      %1537 = dma.done [#allocation8], 16
    $region57: #{lstm_decision_rollout.1} parent=1 // pred_fallthru
      _
    %1538 = vsyncpa [#allocation6], 1
    %1539 = vsyncpa [#allocation8], 1

</llo_original>
